<compile_context>
chip_gen: v6e
topology: v6e:2x2x1
jax: 0.10.0
libtpu: 0.0.40
codegen_flags: <defaults>
</compile_context>

<pallas_src>
import functools
import math

import jax
import jax.numpy as jnp
from jax.experimental import pallas as pl
from jax.experimental.pallas import tpu as pltpu

LN_EPS = 1e-6
NEG_INF = -1e30
_GELU_C = math.sqrt(2.0 / math.pi)


def _round_up(n, m):
    return ((n + m - 1) // m) * m


def _seq_pad(s):
    # lane-dense (S, S) score tiles for real ViT sequence lengths (e.g. 197 -> 256);
    # tiny demo sequences only need sublane (8) alignment.
    return _round_up(s, 128) if s > 64 else _round_up(s, 8)


def _heads_per_group(num_heads, head_dim):
    hpg = max(1, min(num_heads, 128 // max(1, head_dim)))
    while num_heads % hpg:
        hpg -= 1
    return hpg


def _vmem_limit_bytes():
    mib = 1024 * 1024
    try:
        cap = int(getattr(pltpu.get_tpu_info(), "vmem_capacity_bytes", 128 * mib))
    except Exception:
        cap = 128 * mib
    # leave headroom for compiler-internal scratch; ~48 MiB on v7x (64 MiB VMEM),
    # ~100 MiB on v5e/v6e (128 MiB VMEM).
    return int(max(32 * mib, min(cap - 16 * mib, 100 * mib)))


# ----------------------------- in-kernel helpers -----------------------------

def _layernorm(x, w, b):
    # torch.nn.LayerNorm(eps=1e-6): biased variance over the last axis (f32 math).
    mean = jnp.mean(x, axis=-1, keepdims=True)
    xc = x - mean
    var = jnp.mean(xc * xc, axis=-1, keepdims=True)
    return xc * jax.lax.rsqrt(var + LN_EPS) * w + b


def _gelu(x):
    # tanh-approximate GELU: tanh runs on the EUP slot instead of ~10 VALU ops/elem.
    # Drift vs torch's exact-erf GELU is ~1e-3 abs, within the bf16-matmul budget.
    return 0.5 * x * (1.0 + jnp.tanh(_GELU_C * (x + 0.044715 * x * x * x)))


# --------------------------------- kernel ------------------------------------

def encoder_kernel(x_ref, pos_ref, kbias_ref, pe_w_ref, pe_b_ref, cls_ref,
                   ln1w_ref, ln1b_ref, qkvw_ref, qkvb_ref,
                   projw_ref, projb_ref, ln2w_ref, ln2b_ref,
                   fc1w_ref, fc1b_ref, fc2w_ref, fc2b_ref,
                   normw_ref, normb_ref,
                   o_ref, carry, attn_buf,
                   *, num_heads, head_dim, heads_per_group):
    d = pl.program_id(1)
    D = num_heads * head_dim
    scale = head_dim ** -0.5

    # ---- depth step 0: fused patch embed + cls token + positional embedding ----
    @pl.when(d == 0)
    def _():
        pos = pos_ref[0]                                   # (S_pad, D) f32
        tok = (jnp.dot(x_ref[0].astype(jnp.bfloat16), pe_w_ref[...],
                       preferred_element_type=jnp.float32)
               + pe_b_ref[...] + pos)
        carry[...] = tok
        # Overwrite row 0 with the cls token plus its positional embedding.
        # (pos row 0 is zero in the use_pe/(B,L,D) path; the real cls PE otherwise.)
        carry[0:1, :] = cls_ref[...] + pos[0:1, :]

    x = carry[...]                                          # (S_pad, D) f32
    kbias = kbias_ref[...]                                  # (1, S_pad): 0 valid / -1e30 pad

    # ---- pre-norm multi-head self-attention ----
    xn = _layernorm(x, ln1w_ref[0], ln1b_ref[0])
    # Fused full-width QKV projection: (S, D) @ (D, 3D) on the MXU in bf16.
    qkv = (jnp.dot(xn.astype(jnp.bfloat16), qkvw_ref[0],
                   preferred_element_type=jnp.float32) + qkvb_ref[0])   # (S, 3D) f32

    gw = heads_per_group * head_dim
    for g in range(num_heads // heads_per_group):           # static unroll (small)
        glo = g * gw
        ohs = []
        for hh in range(heads_per_group):
            lo = glo + hh * head_dim
            hi = lo + head_dim
            # fold 1/sqrt(hd) into q: O(S*D) instead of O(H*S^2) on the scores.
            qh = (qkv[:, lo:hi] * scale).astype(jnp.bfloat16)
            kh = qkv[:, D + lo:D + hi].astype(jnp.bfloat16)
            vh = qkv[:, 2 * D + lo:2 * D + hi].astype(jnp.bfloat16)
            # scores = q @ k^T without an explicit transpose (contract last dims).
            s = jax.lax.dot_general(qh, kh, (((1,), (1,)), ((), ())),
                                    preferred_element_type=jnp.float32)  # (S, S)
            s = s + kbias
            s = s - jnp.max(s, axis=-1, keepdims=True)
            e = jnp.exp(s)
            p = e * pl.reciprocal(jnp.sum(e, axis=-1, keepdims=True), approx=True)
            ohs.append(jnp.dot(p.astype(jnp.bfloat16), vh,
                               preferred_element_type=jnp.float32))      # (S, hd)
        # one lane-dense bf16 store per head group (128-wide when hd*hpg == 128)
        blk = ohs[0] if len(ohs) == 1 else jnp.concatenate(ohs, axis=-1)
        attn_buf[:, glo:glo + gw] = blk.astype(jnp.bfloat16)

    # One full-width output projection: (S, D) @ (D, D), bf16 operands, f32 acc.
    attn = (jnp.dot(attn_buf[...], projw_ref[0],
                    preferred_element_type=jnp.float32) + projb_ref[0])
    x = x + attn

    # ---- pre-norm MLP ----
    xn2 = _layernorm(x, ln2w_ref[0], ln2b_ref[0])
    h1 = _gelu(jnp.dot(xn2.astype(jnp.bfloat16), fc1w_ref[0],
                       preferred_element_type=jnp.float32) + fc1b_ref[0])
    h2 = (jnp.dot(h1.astype(jnp.bfloat16), fc2w_ref[0],
                  preferred_element_type=jnp.float32) + fc2b_ref[0])
    y = x + h2
    carry[...] = y                                          # stays resident in VMEM

    # ---- last depth step: fused final LayerNorm, single HBM writeback per image ----
    @pl.when(d == pl.num_programs(1) - 1)
    def _():
        o_ref[0] = _layernorm(y, normw_ref[...], normb_ref[...]).astype(o_ref.dtype)


# ------------------------------ pallas wrapper --------------------------------

def _cspec(a):
    nd = a.ndim
    return pl.BlockSpec(tuple(a.shape), lambda b, d, _nd=nd: (0,) * _nd)


def _dspec(a):
    nd = a.ndim
    return pl.BlockSpec((1,) + tuple(a.shape[1:]),
                        lambda b, d, _nd=nd: (d,) + (0,) * (_nd - 1))


def mae_vit_encoder_forward(x, pos_embed, params, num_heads):
    """x: (B, L, C*P*P); pos_embed: (B, L, D), (B, L+1, D) or None.
    Returns (B, L+1, D) float32 (head = nn.Identity since num_classes == 0)."""
    B, L, in_dim = x.shape
    D = int(params['pe_w'].shape[1])
    depth = int(params['qkv_w'].shape[0])
    Dh = int(params['fc1_w'].shape[-1])
    assert depth >= 1, "fused encoder kernel expects depth >= 1"
    assert D % num_heads == 0
    head_dim = D // num_heads
    hpg = _heads_per_group(num_heads, head_dim)

    S = L + 1
    S_pad = _seq_pad(S)

    # JAX glue (once per forward): reserve row 0 for cls, pad the sequence.
    x_pad = jnp.pad(x.astype(jnp.float32), ((0, 0), (1, S_pad - S), (0, 0)))
    if pos_embed is None:                       # use_pe == False
        pos_pad = jnp.zeros((B, S_pad, D), jnp.float32)
    elif pos_embed.shape[1] == L:               # use_pe path: cls token gets zero PE
        pos_pad = jnp.pad(pos_embed.astype(jnp.float32),
                          ((0, 0), (1, S_pad - S), (0, 0)))
    else:                                       # pos_embed already covers the cls token
        pos_pad = jnp.pad(pos_embed.astype(jnp.float32),
                          ((0, 0), (0, S_pad - S), (0, 0)))

    # additive attention bias masking padded keys
    kbias = jnp.where(jnp.arange(S_pad) < S, 0.0, NEG_INF)
    kbias = kbias.astype(jnp.float32).reshape(1, S_pad)

    operands = (x_pad, pos_pad, kbias,
                params['pe_w'], params['pe_b'], params['cls_token'],
                params['ln1_w'], params['ln1_b'], params['qkv_w'], params['qkv_b'],
                params['proj_w'], params['proj_b'], params['ln2_w'], params['ln2_b'],
                params['fc1_w'], params['fc1_b'], params['fc2_w'], params['fc2_b'],
                params['norm_w'], params['norm_b'])

    in_specs = [pl.BlockSpec((1, S_pad, in_dim), lambda b, d: (b, 0, 0)),   # x (per-b)
                pl.BlockSpec((1, S_pad, D), lambda b, d: (b, 0, 0)),        # pos (per-b)
                _cspec(kbias),
                _cspec(params['pe_w']), _cspec(params['pe_b']),
                _cspec(params['cls_token'])]
    # per-block weights: index map depends on d -> pipeline prefetches block d+1's
    # weights while block d computes (hides the weight DMA at small batch).
    in_specs += [_dspec(params[k]) for k in
                 ('ln1_w', 'ln1_b', 'qkv_w', 'qkv_b', 'proj_w', 'proj_b',
                  'ln2_w', 'ln2_b', 'fc1_w', 'fc1_b', 'fc2_w', 'fc2_b')]
    in_specs += [_cspec(params['norm_w']), _cspec(params['norm_b'])]

    kernel = functools.partial(encoder_kernel, num_heads=num_heads,
                               head_dim=head_dim, heads_per_group=hpg)

    # advisory cost for XLA scheduling of the custom call
    flops = int(B * depth * (2 * S_pad * (4 * D * D + 2 * D * Dh)
                             + 4 * S_pad * S_pad * D)
                + 2 * B * S_pad * in_dim * D)
    transcendentals = int(B * depth * (num_heads * S_pad * S_pad + S_pad * Dh))
    bytes_accessed = int(sum(int(a.size) * a.dtype.itemsize for a in operands)
                         + B * S_pad * D * 4)

    out = pl.pallas_call(
        kernel,
        out_shape=jax.ShapeDtypeStruct((B, S_pad, D), jnp.float32),
        grid_spec=pltpu.PrefetchScalarGridSpec(
            num_scalar_prefetch=0,
            grid=(B, depth),
            in_specs=in_specs,
            out_specs=pl.BlockSpec((1, S_pad, D), lambda b, d: (b, 0, 0)),
            scratch_shapes=[pltpu.VMEM((S_pad, D), jnp.float32),    # activation carry
                            pltpu.VMEM((S_pad, D), jnp.bfloat16)]), # attn head concat
        compiler_params=pltpu.CompilerParams(
            dimension_semantics=("parallel", "arbitrary"),
            vmem_limit_bytes=_vmem_limit_bytes()),
        cost_estimate=pl.CostEstimate(flops=flops,
                                      transcendentals=transcendentals,
                                      bytes_accessed=bytes_accessed),
    )(*operands)

    # drop padded rows; head = nn.Identity() (num_classes == 0)
    return out[:, :S, :]


# --------------------------- deterministic init --------------------------------

def _xavier(key, shape, fan_in, fan_out):
    bound = math.sqrt(6.0 / (fan_in + fan_out))
    return jax.random.uniform(key, shape, jnp.float32, -bound, bound)


def init_params(key, in_dim, D, H, depth, Dh):
    kpe, kpb, kcls, kblk = jax.random.split(key, 4)

    pe_w = _xavier(kpe, (in_dim, D), in_dim, D).astype(jnp.bfloat16)
    kb = 1.0 / math.sqrt(in_dim)
    pe_b = jax.random.uniform(kpb, (1, D), jnp.float32, -kb, kb)
    cls_token = 0.02 * jax.random.normal(kcls, (1, D), jnp.float32)

    qkv_ws, proj_ws, fc1_ws, fc2_ws = [], [], [], []
    for _ in range(depth):
        k0, k1, k2, k3, kblk = jax.random.split(kblk, 5)
        qkv_ws.append(_xavier(k0, (D, 3 * D), D, 3 * D))
        proj_ws.append(_xavier(k1, (D, D), D, D))
        fc1_ws.append(_xavier(k2, (D, Dh), D, Dh))
        fc2_ws.append(_xavier(k3, (Dh, D), Dh, D))

    return dict(
        pe_w=pe_w, pe_b=pe_b, cls_token=cls_token,
        # per-block weights stacked along a leading depth axis (pipelined per grid step)
        ln1_w=jnp.ones((depth, 1, D), jnp.float32),
        ln1_b=jnp.zeros((depth, 1, D), jnp.float32),
        qkv_w=jnp.stack(qkv_ws).astype(jnp.bfloat16),
        qkv_b=jnp.zeros((depth, 1, 3 * D), jnp.float32),
        proj_w=jnp.stack(proj_ws).astype(jnp.bfloat16),
        proj_b=jnp.zeros((depth, 1, D), jnp.float32),
        ln2_w=jnp.ones((depth, 1, D), jnp.float32),
        ln2_b=jnp.zeros((depth, 1, D), jnp.float32),
        fc1_w=jnp.stack(fc1_ws).astype(jnp.bfloat16),
        fc1_b=jnp.zeros((depth, 1, Dh), jnp.float32),
        fc2_w=jnp.stack(fc2_ws).astype(jnp.bfloat16),
        fc2_b=jnp.zeros((depth, 1, D), jnp.float32),
        norm_w=jnp.ones((1, D), jnp.float32),
        norm_b=jnp.zeros((1, D), jnp.float32),
    )


# ----------------------------------- main --------------------------------------

if __name__ == "__main__":
    # Small, forward-consistent shapes.
    B, L = 2, 8                 # batch, patch-tokens per sample
    P, C = 4, 3                 # patch_size, in_chans
    D, H, depth = 32, 4, 2      # embed_dim, num_heads, depth
    mlp_ratio = 4.0
    Dh = int(D * mlp_ratio)

    key = jax.random.PRNGKey(0)
    kx, kpe, kparams = jax.random.split(key, 3)
    x = jax.random.normal(kx, (B, L, C * P * P), jnp.float32)
    pos_embed = 0.02 * jax.random.normal(kpe, (B, L, D), jnp.float32)
    params = init_params(kparams, C * P * P, D, H, depth, Dh)

    out = mae_vit_encoder_forward(x, pos_embed, params, num_heads=H)
    out = jax.block_until_ready(out)
    assert out.shape == (B, L + 1, D), out.shape
    assert bool(jnp.all(jnp.isfinite(out)))
    print("KERNEL_OK")
</pallas_src>

<mosaic_0001>
module attributes {stable_mosaic.version = 11 : i64} {
  func.func @encoder_kernel(%arg0: i32, %arg1: i32, %arg2: memref<1x16x48xf32, #tpu.memory_space<vmem>>, %arg3: memref<1x16x32xf32, #tpu.memory_space<vmem>>, %arg4: memref<1x16xf32, #tpu.memory_space<vmem>>, %arg5: memref<48x32xbf16, #tpu.memory_space<vmem>>, %arg6: memref<1x32xf32, #tpu.memory_space<vmem>>, %arg7: memref<1x32xf32, #tpu.memory_space<vmem>>, %arg8: memref<1x1x32xf32, #tpu.memory_space<vmem>>, %arg9: memref<1x1x32xf32, #tpu.memory_space<vmem>>, %arg10: memref<1x32x96xbf16, #tpu.memory_space<vmem>>, %arg11: memref<1x1x96xf32, #tpu.memory_space<vmem>>, %arg12: memref<1x32x32xbf16, #tpu.memory_space<vmem>>, %arg13: memref<1x1x32xf32, #tpu.memory_space<vmem>>, %arg14: memref<1x1x32xf32, #tpu.memory_space<vmem>>, %arg15: memref<1x1x32xf32, #tpu.memory_space<vmem>>, %arg16: memref<1x32x128xbf16, #tpu.memory_space<vmem>>, %arg17: memref<1x1x128xf32, #tpu.memory_space<vmem>>, %arg18: memref<1x128x32xbf16, #tpu.memory_space<vmem>>, %arg19: memref<1x1x32xf32, #tpu.memory_space<vmem>>, %arg20: memref<1x32xf32, #tpu.memory_space<vmem>>, %arg21: memref<1x32xf32, #tpu.memory_space<vmem>>, %arg22: memref<1x16x32xf32, #tpu.memory_space<vmem>>, %arg23: memref<16x32xf32, #tpu.memory_space<vmem>>, %arg24: memref<16x32xbf16, #tpu.memory_space<vmem>>) attributes {dimension_semantics = [#tpu.dimension_semantics<parallel>, #tpu.dimension_semantics<arbitrary>], iteration_bounds = array<i64: 2, 2>, scalar_prefetch = 0 : i64, scratch_operands = 2 : i64, tpu.core_type = #tpu.core_type<tc>, window_params = [{transform_indices = @transform_0, window_bounds = array<i64: 1, 16, 48>}, {transform_indices = @transform_1, window_bounds = array<i64: 1, 16, 32>}, {pipeline_mode = #tpu.pipeline_mode<synchronous>, transform_indices = @transform_2, window_bounds = array<i64: 1, 16>}, {pipeline_mode = #tpu.pipeline_mode<synchronous>, transform_indices = @transform_3, window_bounds = array<i64: 48, 32>}, {pipeline_mode = #tpu.pipeline_mode<synchronous>, transform_indices = @transform_4, window_bounds = array<i64: 1, 32>}, {pipeline_mode = #tpu.pipeline_mode<synchronous>, transform_indices = @transform_5, window_bounds = array<i64: 1, 32>}, {transform_indices = @transform_6, window_bounds = array<i64: 1, 1, 32>}, {transform_indices = @transform_7, window_bounds = array<i64: 1, 1, 32>}, {transform_indices = @transform_8, window_bounds = array<i64: 1, 32, 96>}, {transform_indices = @transform_9, window_bounds = array<i64: 1, 1, 96>}, {transform_indices = @transform_10, window_bounds = array<i64: 1, 32, 32>}, {transform_indices = @transform_11, window_bounds = array<i64: 1, 1, 32>}, {transform_indices = @transform_12, window_bounds = array<i64: 1, 1, 32>}, {transform_indices = @transform_13, window_bounds = array<i64: 1, 1, 32>}, {transform_indices = @transform_14, window_bounds = array<i64: 1, 32, 128>}, {transform_indices = @transform_15, window_bounds = array<i64: 1, 1, 128>}, {transform_indices = @transform_16, window_bounds = array<i64: 1, 128, 32>}, {transform_indices = @transform_17, window_bounds = array<i64: 1, 1, 32>}, {pipeline_mode = #tpu.pipeline_mode<synchronous>, transform_indices = @transform_18, window_bounds = array<i64: 1, 32>}, {pipeline_mode = #tpu.pipeline_mode<synchronous>, transform_indices = @transform_19, window_bounds = array<i64: 1, 32>}, {transform_indices = @transform_20, window_bounds = array<i64: 1, 16, 32>}]} {
    %c0_i32 = arith.constant 0 : i32
    %0 = arith.cmpi eq, %arg1, %c0_i32 : i32
    %1 = arith.extui %0 : i1 to i32
    %c0_i32_0 = arith.constant 0 : i32
    %2 = arith.cmpi ne, %1, %c0_i32_0 : i32
    scf.if %2 {
      %c0_84 = arith.constant 0 : index
      %c0_85 = arith.constant 0 : index
      %c0_86 = arith.constant 0 : index
      %199 = vector.load %arg3[%c0_84, %c0_85, %c0_86] : memref<1x16x32xf32, #tpu.memory_space<vmem>>, vector<1x16x32xf32>
      %200 = vector.shape_cast %199 : vector<1x16x32xf32> to vector<16x32xf32>
      %c0_87 = arith.constant 0 : index
      %c0_88 = arith.constant 0 : index
      %c0_89 = arith.constant 0 : index
      %201 = vector.load %arg2[%c0_87, %c0_88, %c0_89] : memref<1x16x48xf32, #tpu.memory_space<vmem>>, vector<1x16x48xf32>
      %202 = vector.shape_cast %201 : vector<1x16x48xf32> to vector<16x48xf32>
      %203 = arith.truncf %202 : vector<16x48xf32> to vector<16x48xbf16>
      %c0_90 = arith.constant 0 : index
      %c0_91 = arith.constant 0 : index
      %204 = vector.load %arg5[%c0_90, %c0_91] : memref<48x32xbf16, #tpu.memory_space<vmem>>, vector<48x32xbf16>
      %cst_92 = arith.constant dense<0.000000e+00> : vector<16x32xf32>
      %205 = tpu.matmul %203, %204, %cst_92 {dimension_numbers = #tpu.dot_dimension_numbers<[1], [0], [0], [1], [0, 0, 1, 1], [], []>} : vector<16x48xbf16>, vector<48x32xbf16>, vector<16x32xf32> -> vector<16x32xf32>
      %c0_93 = arith.constant 0 : index
      %c0_94 = arith.constant 0 : index
      %206 = vector.load %arg6[%c0_93, %c0_94] : memref<1x32xf32, #tpu.memory_space<vmem>>, vector<1x32xf32>
      %207 = vector.broadcast %206 : vector<1x32xf32> to vector<16x32xf32>
      %208 = arith.addf %205, %207 : vector<16x32xf32>
      %209 = arith.addf %208, %200 : vector<16x32xf32>
      %c0_95 = arith.constant 0 : index
      %c0_96 = arith.constant 0 : index
      %210 = vector.load %arg23[%c0_95, %c0_96] : memref<16x32xf32, #tpu.memory_space<vmem>>, vector<16x32xf32>
      tpu.vector_store %arg23[%c0_95, %c0_96], %209 {strides = array<i32>} : memref<16x32xf32, #tpu.memory_space<vmem>>, vector<16x32xf32>,
      %c0_97 = arith.constant 0 : index
      %c0_98 = arith.constant 0 : index
      %211 = vector.load %arg7[%c0_97, %c0_98] : memref<1x32xf32, #tpu.memory_space<vmem>>, vector<1x32xf32>
      %212 = vector.extract_strided_slice %200 {offsets = [0, 0], sizes = [1, 32], strides = [1, 1]} : vector<16x32xf32> to vector<1x32xf32>
      %213 = arith.addf %211, %212 : vector<1x32xf32>
      %c0_99 = arith.constant 0 : index
      %c0_100 = arith.constant 0 : index
      %214 = vector.load %arg23[%c0_99, %c0_100] : memref<16x32xf32, #tpu.memory_space<vmem>>, vector<1x32xf32>
      tpu.vector_store %arg23[%c0_99, %c0_100], %213 {strides = array<i32>} : memref<16x32xf32, #tpu.memory_space<vmem>>, vector<1x32xf32>,
    } else {
    }
    %c0 = arith.constant 0 : index
    %c0_1 = arith.constant 0 : index
    %3 = vector.load %arg23[%c0, %c0_1] : memref<16x32xf32, #tpu.memory_space<vmem>>, vector<16x32xf32>
    %c0_2 = arith.constant 0 : index
    %c0_3 = arith.constant 0 : index
    %4 = vector.load %arg4[%c0_2, %c0_3] : memref<1x16xf32, #tpu.memory_space<vmem>>, vector<1x16xf32>
    %c0_4 = arith.constant 0 : index
    %c0_5 = arith.constant 0 : index
    %c0_6 = arith.constant 0 : index
    %5 = vector.load %arg8[%c0_4, %c0_5, %c0_6] : memref<1x1x32xf32, #tpu.memory_space<vmem>>, vector<1x1x32xf32>
    %6 = vector.shape_cast %5 : vector<1x1x32xf32> to vector<1x32xf32>
    %c0_7 = arith.constant 0 : index
    %c0_8 = arith.constant 0 : index
    %c0_9 = arith.constant 0 : index
    %7 = vector.load %arg9[%c0_7, %c0_8, %c0_9] : memref<1x1x32xf32, #tpu.memory_space<vmem>>, vector<1x1x32xf32>
    %8 = vector.shape_cast %7 : vector<1x1x32xf32> to vector<1x32xf32>
    %cst = arith.constant dense<0.000000e+00> : vector<16xf32>
    %9 = vector.multi_reduction <add>, %3, %cst [1] : vector<16x32xf32> to vector<16xf32>
    %10 = vector.shape_cast %9 : vector<16xf32> to vector<16x1xf32>
    %cst_10 = arith.constant 3.200000e+01 : f32
    %11 = vector.broadcast %cst_10 : f32 to vector<16x1xf32>
    %12 = arith.divf %10, %11 : vector<16x1xf32>
    %13 = vector.broadcast %12 : vector<16x1xf32> to vector<16x32xf32>
    %14 = arith.subf %3, %13 : vector<16x32xf32>
    %15 = arith.mulf %14, %14 : vector<16x32xf32>
    %cst_11 = arith.constant dense<0.000000e+00> : vector<16xf32>
    %16 = vector.multi_reduction <add>, %15, %cst_11 [1] : vector<16x32xf32> to vector<16xf32>
    %17 = vector.shape_cast %16 : vector<16xf32> to vector<16x1xf32>
    %cst_12 = arith.constant 3.200000e+01 : f32
    %18 = vector.broadcast %cst_12 : f32 to vector<16x1xf32>
    %19 = arith.divf %17, %18 : vector<16x1xf32>
    %cst_13 = arith.constant 9.99999997E-7 : f32
    %20 = vector.broadcast %cst_13 : f32 to vector<16x1xf32>
    %21 = arith.addf %19, %20 : vector<16x1xf32>
    %22 = math.rsqrt %21 : vector<16x1xf32>
    %23 = vector.broadcast %22 : vector<16x1xf32> to vector<16x32xf32>
    %24 = arith.mulf %14, %23 : vector<16x32xf32>
    %25 = vector.broadcast %6 : vector<1x32xf32> to vector<16x32xf32>
    %26 = arith.mulf %24, %25 : vector<16x32xf32>
    %27 = vector.broadcast %8 : vector<1x32xf32> to vector<16x32xf32>
    %28 = arith.addf %26, %27 : vector<16x32xf32>
    %29 = arith.truncf %28 : vector<16x32xf32> to vector<16x32xbf16>
    %c0_14 = arith.constant 0 : index
    %c0_15 = arith.constant 0 : index
    %c0_16 = arith.constant 0 : index
    %30 = vector.load %arg10[%c0_14, %c0_15, %c0_16] : memref<1x32x96xbf16, #tpu.memory_space<vmem>>, vector<1x32x96xbf16>
    %31 = vector.shape_cast %30 : vector<1x32x96xbf16> to vector<32x96xbf16>
    %cst_17 = arith.constant dense<0.000000e+00> : vector<16x96xf32>
    %32 = tpu.matmul %29, %31, %cst_17 {dimension_numbers = #tpu.dot_dimension_numbers<[1], [0], [0], [1], [0, 0, 1, 1], [], []>} : vector<16x32xbf16>, vector<32x96xbf16>, vector<16x96xf32> -> vector<16x96xf32>
    %c0_18 = arith.constant 0 : index
    %c0_19 = arith.constant 0 : index
    %c0_20 = arith.constant 0 : index
    %33 = vector.load %arg11[%c0_18, %c0_19, %c0_20] : memref<1x1x96xf32, #tpu.memory_space<vmem>>, vector<1x1x96xf32>
    %34 = vector.shape_cast %33 : vector<1x1x96xf32> to vector<1x96xf32>
    %35 = vector.broadcast %34 : vector<1x96xf32> to vector<16x96xf32>
    %36 = arith.addf %32, %35 : vector<16x96xf32>
    %37 = vector.extract_strided_slice %36 {offsets = [0, 0], sizes = [16, 8], strides = [1, 1]} : vector<16x96xf32> to vector<16x8xf32>
    %cst_21 = arith.constant 0.353553385 : f32
    %38 = vector.broadcast %cst_21 : f32 to vector<16x8xf32>
    %39 = arith.mulf %37, %38 : vector<16x8xf32>
    %40 = arith.truncf %39 : vector<16x8xf32> to vector<16x8xbf16>
    %41 = vector.extract_strided_slice %36 {offsets = [0, 32], sizes = [16, 8], strides = [1, 1]} : vector<16x96xf32> to vector<16x8xf32>
    %42 = arith.truncf %41 : vector<16x8xf32> to vector<16x8xbf16>
    %43 = vector.extract_strided_slice %36 {offsets = [0, 64], sizes = [16, 8], strides = [1, 1]} : vector<16x96xf32> to vector<16x8xf32>
    %44 = arith.truncf %43 : vector<16x8xf32> to vector<16x8xbf16>
    %cst_22 = arith.constant dense<0.000000e+00> : vector<16x16xf32>
    %45 = tpu.matmul %40, %42, %cst_22 {dimension_numbers = #tpu.dot_dimension_numbers<[1], [1], [0], [0], [0, 0, 1, 0], [], []>} : vector<16x8xbf16>, vector<16x8xbf16>, vector<16x16xf32> -> vector<16x16xf32>
    %46 = vector.broadcast %4 : vector<1x16xf32> to vector<16x16xf32>
    %47 = arith.addf %45, %46 : vector<16x16xf32>
    %cst_23 = arith.constant dense<0xFF800000> : vector<16xf32>
    %48 = vector.multi_reduction <maximumf>, %47, %cst_23 [1] : vector<16x16xf32> to vector<16xf32>
    %49 = vector.shape_cast %48 : vector<16xf32> to vector<16x1xf32>
    %50 = vector.broadcast %49 : vector<16x1xf32> to vector<16x16xf32>
    %51 = arith.subf %47, %50 : vector<16x16xf32>
    %52 = math.exp %51 : vector<16x16xf32>
    %cst_24 = arith.constant dense<0.000000e+00> : vector<16xf32>
    %53 = vector.multi_reduction <add>, %52, %cst_24 [1] : vector<16x16xf32> to vector<16xf32>
    %54 = vector.shape_cast %53 : vector<16xf32> to vector<16x1xf32>
    %55 = tpu.reciprocal %54 {approx = true} : vector<16x1xf32> -> vector<16x1xf32>
    %56 = vector.broadcast %55 : vector<16x1xf32> to vector<16x16xf32>
    %57 = arith.mulf %52, %56 : vector<16x16xf32>
    %58 = arith.truncf %57 : vector<16x16xf32> to vector<16x16xbf16>
    %cst_25 = arith.constant dense<0.000000e+00> : vector<16x8xf32>
    %59 = tpu.matmul %58, %44, %cst_25 {dimension_numbers = #tpu.dot_dimension_numbers<[1], [0], [0], [1], [0, 0, 1, 1], [], []>} : vector<16x16xbf16>, vector<16x8xbf16>, vector<16x8xf32> -> vector<16x8xf32>
    %60 = vector.extract_strided_slice %36 {offsets = [0, 8], sizes = [16, 8], strides = [1, 1]} : vector<16x96xf32> to vector<16x8xf32>
    %cst_26 = arith.constant 0.353553385 : f32
    %61 = vector.broadcast %cst_26 : f32 to vector<16x8xf32>
    %62 = arith.mulf %60, %61 : vector<16x8xf32>
    %63 = arith.truncf %62 : vector<16x8xf32> to vector<16x8xbf16>
    %64 = vector.extract_strided_slice %36 {offsets = [0, 40], sizes = [16, 8], strides = [1, 1]} : vector<16x96xf32> to vector<16x8xf32>
    %65 = arith.truncf %64 : vector<16x8xf32> to vector<16x8xbf16>
    %66 = vector.extract_strided_slice %36 {offsets = [0, 72], sizes = [16, 8], strides = [1, 1]} : vector<16x96xf32> to vector<16x8xf32>
    %67 = arith.truncf %66 : vector<16x8xf32> to vector<16x8xbf16>
    %cst_27 = arith.constant dense<0.000000e+00> : vector<16x16xf32>
    %68 = tpu.matmul %63, %65, %cst_27 {dimension_numbers = #tpu.dot_dimension_numbers<[1], [1], [0], [0], [0, 0, 1, 0], [], []>} : vector<16x8xbf16>, vector<16x8xbf16>, vector<16x16xf32> -> vector<16x16xf32>
    %69 = vector.broadcast %4 : vector<1x16xf32> to vector<16x16xf32>
    %70 = arith.addf %68, %69 : vector<16x16xf32>
    %cst_28 = arith.constant dense<0xFF800000> : vector<16xf32>
    %71 = vector.multi_reduction <maximumf>, %70, %cst_28 [1] : vector<16x16xf32> to vector<16xf32>
    %72 = vector.shape_cast %71 : vector<16xf32> to vector<16x1xf32>
    %73 = vector.broadcast %72 : vector<16x1xf32> to vector<16x16xf32>
    %74 = arith.subf %70, %73 : vector<16x16xf32>
    %75 = math.exp %74 : vector<16x16xf32>
    %cst_29 = arith.constant dense<0.000000e+00> : vector<16xf32>
    %76 = vector.multi_reduction <add>, %75, %cst_29 [1] : vector<16x16xf32> to vector<16xf32>
    %77 = vector.shape_cast %76 : vector<16xf32> to vector<16x1xf32>
    %78 = tpu.reciprocal %77 {approx = true} : vector<16x1xf32> -> vector<16x1xf32>
    %79 = vector.broadcast %78 : vector<16x1xf32> to vector<16x16xf32>
    %80 = arith.mulf %75, %79 : vector<16x16xf32>
    %81 = arith.truncf %80 : vector<16x16xf32> to vector<16x16xbf16>
    %cst_30 = arith.constant dense<0.000000e+00> : vector<16x8xf32>
    %82 = tpu.matmul %81, %67, %cst_30 {dimension_numbers = #tpu.dot_dimension_numbers<[1], [0], [0], [1], [0, 0, 1, 1], [], []>} : vector<16x16xbf16>, vector<16x8xbf16>, vector<16x8xf32> -> vector<16x8xf32>
    %83 = vector.extract_strided_slice %36 {offsets = [0, 16], sizes = [16, 8], strides = [1, 1]} : vector<16x96xf32> to vector<16x8xf32>
    %cst_31 = arith.constant 0.353553385 : f32
    %84 = vector.broadcast %cst_31 : f32 to vector<16x8xf32>
    %85 = arith.mulf %83, %84 : vector<16x8xf32>
    %86 = arith.truncf %85 : vector<16x8xf32> to vector<16x8xbf16>
    %87 = vector.extract_strided_slice %36 {offsets = [0, 48], sizes = [16, 8], strides = [1, 1]} : vector<16x96xf32> to vector<16x8xf32>
    %88 = arith.truncf %87 : vector<16x8xf32> to vector<16x8xbf16>
    %89 = vector.extract_strided_slice %36 {offsets = [0, 80], sizes = [16, 8], strides = [1, 1]} : vector<16x96xf32> to vector<16x8xf32>
    %90 = arith.truncf %89 : vector<16x8xf32> to vector<16x8xbf16>
    %cst_32 = arith.constant dense<0.000000e+00> : vector<16x16xf32>
    %91 = tpu.matmul %86, %88, %cst_32 {dimension_numbers = #tpu.dot_dimension_numbers<[1], [1], [0], [0], [0, 0, 1, 0], [], []>} : vector<16x8xbf16>, vector<16x8xbf16>, vector<16x16xf32> -> vector<16x16xf32>
    %92 = vector.broadcast %4 : vector<1x16xf32> to vector<16x16xf32>
    %93 = arith.addf %91, %92 : vector<16x16xf32>
    %cst_33 = arith.constant dense<0xFF800000> : vector<16xf32>
    %94 = vector.multi_reduction <maximumf>, %93, %cst_33 [1] : vector<16x16xf32> to vector<16xf32>
    %95 = vector.shape_cast %94 : vector<16xf32> to vector<16x1xf32>
    %96 = vector.broadcast %95 : vector<16x1xf32> to vector<16x16xf32>
    %97 = arith.subf %93, %96 : vector<16x16xf32>
    %98 = math.exp %97 : vector<16x16xf32>
    %cst_34 = arith.constant dense<0.000000e+00> : vector<16xf32>
    %99 = vector.multi_reduction <add>, %98, %cst_34 [1] : vector<16x16xf32> to vector<16xf32>
    %100 = vector.shape_cast %99 : vector<16xf32> to vector<16x1xf32>
    %101 = tpu.reciprocal %100 {approx = true} : vector<16x1xf32> -> vector<16x1xf32>
    %102 = vector.broadcast %101 : vector<16x1xf32> to vector<16x16xf32>
    %103 = arith.mulf %98, %102 : vector<16x16xf32>
    %104 = arith.truncf %103 : vector<16x16xf32> to vector<16x16xbf16>
    %cst_35 = arith.constant dense<0.000000e+00> : vector<16x8xf32>
    %105 = tpu.matmul %104, %90, %cst_35 {dimension_numbers = #tpu.dot_dimension_numbers<[1], [0], [0], [1], [0, 0, 1, 1], [], []>} : vector<16x16xbf16>, vector<16x8xbf16>, vector<16x8xf32> -> vector<16x8xf32>
    %106 = vector.extract_strided_slice %36 {offsets = [0, 24], sizes = [16, 8], strides = [1, 1]} : vector<16x96xf32> to vector<16x8xf32>
    %cst_36 = arith.constant 0.353553385 : f32
    %107 = vector.broadcast %cst_36 : f32 to vector<16x8xf32>
    %108 = arith.mulf %106, %107 : vector<16x8xf32>
    %109 = arith.truncf %108 : vector<16x8xf32> to vector<16x8xbf16>
    %110 = vector.extract_strided_slice %36 {offsets = [0, 56], sizes = [16, 8], strides = [1, 1]} : vector<16x96xf32> to vector<16x8xf32>
    %111 = arith.truncf %110 : vector<16x8xf32> to vector<16x8xbf16>
    %112 = vector.extract_strided_slice %36 {offsets = [0, 88], sizes = [16, 8], strides = [1, 1]} : vector<16x96xf32> to vector<16x8xf32>
    %113 = arith.truncf %112 : vector<16x8xf32> to vector<16x8xbf16>
    %cst_37 = arith.constant dense<0.000000e+00> : vector<16x16xf32>
    %114 = tpu.matmul %109, %111, %cst_37 {dimension_numbers = #tpu.dot_dimension_numbers<[1], [1], [0], [0], [0, 0, 1, 0], [], []>} : vector<16x8xbf16>, vector<16x8xbf16>, vector<16x16xf32> -> vector<16x16xf32>
    %115 = vector.broadcast %4 : vector<1x16xf32> to vector<16x16xf32>
    %116 = arith.addf %114, %115 : vector<16x16xf32>
    %cst_38 = arith.constant dense<0xFF800000> : vector<16xf32>
    %117 = vector.multi_reduction <maximumf>, %116, %cst_38 [1] : vector<16x16xf32> to vector<16xf32>
    %118 = vector.shape_cast %117 : vector<16xf32> to vector<16x1xf32>
    %119 = vector.broadcast %118 : vector<16x1xf32> to vector<16x16xf32>
    %120 = arith.subf %116, %119 : vector<16x16xf32>
    %121 = math.exp %120 : vector<16x16xf32>
    %cst_39 = arith.constant dense<0.000000e+00> : vector<16xf32>
    %122 = vector.multi_reduction <add>, %121, %cst_39 [1] : vector<16x16xf32> to vector<16xf32>
    %123 = vector.shape_cast %122 : vector<16xf32> to vector<16x1xf32>
    %124 = tpu.reciprocal %123 {approx = true} : vector<16x1xf32> -> vector<16x1xf32>
    %125 = vector.broadcast %124 : vector<16x1xf32> to vector<16x16xf32>
    %126 = arith.mulf %121, %125 : vector<16x16xf32>
    %127 = arith.truncf %126 : vector<16x16xf32> to vector<16x16xbf16>
    %cst_40 = arith.constant dense<0.000000e+00> : vector<16x8xf32>
    %128 = tpu.matmul %127, %113, %cst_40 {dimension_numbers = #tpu.dot_dimension_numbers<[1], [0], [0], [1], [0, 0, 1, 1], [], []>} : vector<16x16xbf16>, vector<16x8xbf16>, vector<16x8xf32> -> vector<16x8xf32>
    %129 = tpu.concatenate %59, %82, %105, %128 in 1 : vector<16x8xf32>, vector<16x8xf32>, vector<16x8xf32>, vector<16x8xf32> -> vector<16x32xf32>
    %130 = arith.truncf %129 : vector<16x32xf32> to vector<16x32xbf16>
    %c0_41 = arith.constant 0 : index
    %c0_42 = arith.constant 0 : index
    %131 = vector.load %arg24[%c0_41, %c0_42] : memref<16x32xbf16, #tpu.memory_space<vmem>>, vector<16x32xbf16>
    tpu.vector_store %arg24[%c0_41, %c0_42], %130 {strides = array<i32>} : memref<16x32xbf16, #tpu.memory_space<vmem>>, vector<16x32xbf16>,
    %c0_43 = arith.constant 0 : index
    %c0_44 = arith.constant 0 : index
    %132 = vector.load %arg24[%c0_43, %c0_44] : memref<16x32xbf16, #tpu.memory_space<vmem>>, vector<16x32xbf16>
    %c0_45 = arith.constant 0 : index
    %c0_46 = arith.constant 0 : index
    %c0_47 = arith.constant 0 : index
    %133 = vector.load %arg12[%c0_45, %c0_46, %c0_47] : memref<1x32x32xbf16, #tpu.memory_space<vmem>>, vector<1x32x32xbf16>
    %134 = vector.shape_cast %133 : vector<1x32x32xbf16> to vector<32x32xbf16>
    %cst_48 = arith.constant dense<0.000000e+00> : vector<16x32xf32>
    %135 = tpu.matmul %132, %134, %cst_48 {dimension_numbers = #tpu.dot_dimension_numbers<[1], [0], [0], [1], [0, 0, 1, 1], [], []>} : vector<16x32xbf16>, vector<32x32xbf16>, vector<16x32xf32> -> vector<16x32xf32>
    %c0_49 = arith.constant 0 : index
    %c0_50 = arith.constant 0 : index
    %c0_51 = arith.constant 0 : index
    %136 = vector.load %arg13[%c0_49, %c0_50, %c0_51] : memref<1x1x32xf32, #tpu.memory_space<vmem>>, vector<1x1x32xf32>
    %137 = vector.shape_cast %136 : vector<1x1x32xf32> to vector<1x32xf32>
    %138 = vector.broadcast %137 : vector<1x32xf32> to vector<16x32xf32>
    %139 = arith.addf %135, %138 : vector<16x32xf32>
    %140 = arith.addf %3, %139 : vector<16x32xf32>
    %c0_52 = arith.constant 0 : index
    %c0_53 = arith.constant 0 : index
    %c0_54 = arith.constant 0 : index
    %141 = vector.load %arg14[%c0_52, %c0_53, %c0_54] : memref<1x1x32xf32, #tpu.memory_space<vmem>>, vector<1x1x32xf32>
    %142 = vector.shape_cast %141 : vector<1x1x32xf32> to vector<1x32xf32>
    %c0_55 = arith.constant 0 : index
    %c0_56 = arith.constant 0 : index
    %c0_57 = arith.constant 0 : index
    %143 = vector.load %arg15[%c0_55, %c0_56, %c0_57] : memref<1x1x32xf32, #tpu.memory_space<vmem>>, vector<1x1x32xf32>
    %144 = vector.shape_cast %143 : vector<1x1x32xf32> to vector<1x32xf32>
    %cst_58 = arith.constant dense<0.000000e+00> : vector<16xf32>
    %145 = vector.multi_reduction <add>, %140, %cst_58 [1] : vector<16x32xf32> to vector<16xf32>
    %146 = vector.shape_cast %145 : vector<16xf32> to vector<16x1xf32>
    %cst_59 = arith.constant 3.200000e+01 : f32
    %147 = vector.broadcast %cst_59 : f32 to vector<16x1xf32>
    %148 = arith.divf %146, %147 : vector<16x1xf32>
    %149 = vector.broadcast %148 : vector<16x1xf32> to vector<16x32xf32>
    %150 = arith.subf %140, %149 : vector<16x32xf32>
    %151 = arith.mulf %150, %150 : vector<16x32xf32>
    %cst_60 = arith.constant dense<0.000000e+00> : vector<16xf32>
    %152 = vector.multi_reduction <add>, %151, %cst_60 [1] : vector<16x32xf32> to vector<16xf32>
    %153 = vector.shape_cast %152 : vector<16xf32> to vector<16x1xf32>
    %cst_61 = arith.constant 3.200000e+01 : f32
    %154 = vector.broadcast %cst_61 : f32 to vector<16x1xf32>
    %155 = arith.divf %153, %154 : vector<16x1xf32>
    %cst_62 = arith.constant 9.99999997E-7 : f32
    %156 = vector.broadcast %cst_62 : f32 to vector<16x1xf32>
    %157 = arith.addf %155, %156 : vector<16x1xf32>
    %158 = math.rsqrt %157 : vector<16x1xf32>
    %159 = vector.broadcast %158 : vector<16x1xf32> to vector<16x32xf32>
    %160 = arith.mulf %150, %159 : vector<16x32xf32>
    %161 = vector.broadcast %142 : vector<1x32xf32> to vector<16x32xf32>
    %162 = arith.mulf %160, %161 : vector<16x32xf32>
    %163 = vector.broadcast %144 : vector<1x32xf32> to vector<16x32xf32>
    %164 = arith.addf %162, %163 : vector<16x32xf32>
    %165 = arith.truncf %164 : vector<16x32xf32> to vector<16x32xbf16>
    %c0_63 = arith.constant 0 : index
    %c0_64 = arith.constant 0 : index
    %c0_65 = arith.constant 0 : index
    %166 = vector.load %arg16[%c0_63, %c0_64, %c0_65] : memref<1x32x128xbf16, #tpu.memory_space<vmem>>, vector<1x32x128xbf16>
    %167 = vector.shape_cast %166 : vector<1x32x128xbf16> to vector<32x128xbf16>
    %cst_66 = arith.constant dense<0.000000e+00> : vector<16x128xf32>
    %168 = tpu.matmul %165, %167, %cst_66 {dimension_numbers = #tpu.dot_dimension_numbers<[1], [0], [0], [1], [0, 0, 1, 1], [], []>} : vector<16x32xbf16>, vector<32x128xbf16>, vector<16x128xf32> -> vector<16x128xf32>
    %c0_67 = arith.constant 0 : index
    %c0_68 = arith.constant 0 : index
    %c0_69 = arith.constant 0 : index
    %169 = vector.load %arg17[%c0_67, %c0_68, %c0_69] : memref<1x1x128xf32, #tpu.memory_space<vmem>>, vector<1x1x128xf32>
    %170 = vector.shape_cast %169 : vector<1x1x128xf32> to vector<1x128xf32>
    %171 = vector.broadcast %170 : vector<1x128xf32> to vector<16x128xf32>
    %172 = arith.addf %168, %171 : vector<16x128xf32>
    %cst_70 = arith.constant 5.000000e-01 : f32
    %173 = vector.broadcast %cst_70 : f32 to vector<16x128xf32>
    %174 = arith.mulf %173, %172 : vector<16x128xf32>
    %cst_71 = arith.constant 4.471500e-02 : f32
    %175 = vector.broadcast %cst_71 : f32 to vector<16x128xf32>
    %176 = arith.mulf %175, %172 : vector<16x128xf32>
    %177 = arith.mulf %176, %172 : vector<16x128xf32>
    %178 = arith.mulf %177, %172 : vector<16x128xf32>
    %179 = arith.addf %172, %178 : vector<16x128xf32>
    %cst_72 = arith.constant 0.797884583 : f32
    %180 = vector.broadcast %cst_72 : f32 to vector<16x128xf32>
    %181 = arith.mulf %180, %179 : vector<16x128xf32>
    %182 = math.tanh %181 : vector<16x128xf32>
    %cst_73 = arith.constant 1.000000e+00 : f32
    %183 = vector.broadcast %cst_73 : f32 to vector<16x128xf32>
    %184 = arith.addf %183, %182 : vector<16x128xf32>
    %185 = arith.mulf %174, %184 : vector<16x128xf32>
    %186 = arith.truncf %185 : vector<16x128xf32> to vector<16x128xbf16>
    %c0_74 = arith.constant 0 : index
    %c0_75 = arith.constant 0 : index
    %c0_76 = arith.constant 0 : index
    %187 = vector.load %arg18[%c0_74, %c0_75, %c0_76] : memref<1x128x32xbf16, #tpu.memory_space<vmem>>, vector<1x128x32xbf16>
    %188 = vector.shape_cast %187 : vector<1x128x32xbf16> to vector<128x32xbf16>
    %cst_77 = arith.constant dense<0.000000e+00> : vector<16x32xf32>
    %189 = tpu.matmul %186, %188, %cst_77 {dimension_numbers = #tpu.dot_dimension_numbers<[1], [0], [0], [1], [0, 0, 1, 1], [], []>} : vector<16x128xbf16>, vector<128x32xbf16>, vector<16x32xf32> -> vector<16x32xf32>
    %c0_78 = arith.constant 0 : index
    %c0_79 = arith.constant 0 : index
    %c0_80 = arith.constant 0 : index
    %190 = vector.load %arg19[%c0_78, %c0_79, %c0_80] : memref<1x1x32xf32, #tpu.memory_space<vmem>>, vector<1x1x32xf32>
    %191 = vector.shape_cast %190 : vector<1x1x32xf32> to vector<1x32xf32>
    %192 = vector.broadcast %191 : vector<1x32xf32> to vector<16x32xf32>
    %193 = arith.addf %189, %192 : vector<16x32xf32>
    %194 = arith.addf %140, %193 : vector<16x32xf32>
    %c0_81 = arith.constant 0 : index
    %c0_82 = arith.constant 0 : index
    %195 = vector.load %arg23[%c0_81, %c0_82] : memref<16x32xf32, #tpu.memory_space<vmem>>, vector<16x32xf32>
    tpu.vector_store %arg23[%c0_81, %c0_82], %194 {strides = array<i32>} : memref<16x32xf32, #tpu.memory_space<vmem>>, vector<16x32xf32>,
    %c1_i32 = arith.constant 1 : i32
    %196 = arith.cmpi eq, %arg1, %c1_i32 : i32
    %197 = arith.extui %196 : i1 to i32
    %c0_i32_83 = arith.constant 0 : i32
    %198 = arith.cmpi ne, %197, %c0_i32_83 : i32
    scf.if %198 {
      %c0_84 = arith.constant 0 : index
      %c0_85 = arith.constant 0 : index
      %199 = vector.load %arg20[%c0_84, %c0_85] : memref<1x32xf32, #tpu.memory_space<vmem>>, vector<1x32xf32>
      %c0_86 = arith.constant 0 : index
      %c0_87 = arith.constant 0 : index
      %200 = vector.load %arg21[%c0_86, %c0_87] : memref<1x32xf32, #tpu.memory_space<vmem>>, vector<1x32xf32>
      %cst_88 = arith.constant dense<0.000000e+00> : vector<16xf32>
      %201 = vector.multi_reduction <add>, %194, %cst_88 [1] : vector<16x32xf32> to vector<16xf32>
      %202 = vector.shape_cast %201 : vector<16xf32> to vector<16x1xf32>
      %cst_89 = arith.constant 3.200000e+01 : f32
      %203 = vector.broadcast %cst_89 : f32 to vector<16x1xf32>
      %204 = arith.divf %202, %203 : vector<16x1xf32>
      %205 = vector.broadcast %204 : vector<16x1xf32> to vector<16x32xf32>
      %206 = arith.subf %194, %205 : vector<16x32xf32>
      %207 = arith.mulf %206, %206 : vector<16x32xf32>
      %cst_90 = arith.constant dense<0.000000e+00> : vector<16xf32>
      %208 = vector.multi_reduction <add>, %207, %cst_90 [1] : vector<16x32xf32> to vector<16xf32>
      %209 = vector.shape_cast %208 : vector<16xf32> to vector<16x1xf32>
      %cst_91 = arith.constant 3.200000e+01 : f32
      %210 = vector.broadcast %cst_91 : f32 to vector<16x1xf32>
      %211 = arith.divf %209, %210 : vector<16x1xf32>
      %cst_92 = arith.constant 9.99999997E-7 : f32
      %212 = vector.broadcast %cst_92 : f32 to vector<16x1xf32>
      %213 = arith.addf %211, %212 : vector<16x1xf32>
      %214 = math.rsqrt %213 : vector<16x1xf32>
      %215 = vector.broadcast %214 : vector<16x1xf32> to vector<16x32xf32>
      %216 = arith.mulf %206, %215 : vector<16x32xf32>
      %217 = vector.broadcast %199 : vector<1x32xf32> to vector<16x32xf32>
      %218 = arith.mulf %216, %217 : vector<16x32xf32>
      %219 = vector.broadcast %200 : vector<1x32xf32> to vector<16x32xf32>
      %220 = arith.addf %218, %219 : vector<16x32xf32>
      %c0_93 = arith.constant 0 : index
      %c0_94 = arith.constant 0 : index
      %c0_95 = arith.constant 0 : index
      %221 = vector.load %arg22[%c0_93, %c0_94, %c0_95] : memref<1x16x32xf32, #tpu.memory_space<vmem>>, vector<1x16x32xf32>
      %222 = vector.shape_cast %221 : vector<1x16x32xf32> to vector<16x32xf32>
      %223 = vector.shape_cast %220 : vector<16x32xf32> to vector<1x16x32xf32>
      tpu.vector_store %arg22[%c0_93, %c0_94, %c0_95], %223 {strides = array<i32>} : memref<1x16x32xf32, #tpu.memory_space<vmem>>, vector<1x16x32xf32>,
    } else {
    }
    return
  }
  func.func @transform_0(%arg0: i32, %arg1: i32) -> (i32, i32, i32) {
    %c0_i32 = arith.constant 0 : i32
    %c0_i32_0 = arith.constant 0 : i32
    %c0_i32_1 = arith.constant 0 : i32
    return %arg0, %c0_i32, %c0_i32_0 : i32, i32, i32
  }
  func.func @transform_1(%arg0: i32, %arg1: i32) -> (i32, i32, i32) {
    %c0_i32 = arith.constant 0 : i32
    %c0_i32_0 = arith.constant 0 : i32
    %c0_i32_1 = arith.constant 0 : i32
    return %arg0, %c0_i32, %c0_i32_0 : i32, i32, i32
  }
  func.func @transform_2(%arg0: i32, %arg1: i32) -> (i32, i32) {
    %c0_i32 = arith.constant 0 : i32
    %c0_i32_0 = arith.constant 0 : i32
    %c0_i32_1 = arith.constant 0 : i32
    return %c0_i32, %c0_i32_0 : i32, i32
  }
  func.func @transform_3(%arg0: i32, %arg1: i32) -> (i32, i32) {
    %c0_i32 = arith.constant 0 : i32
    %c0_i32_0 = arith.constant 0 : i32
    %c0_i32_1 = arith.constant 0 : i32
    return %c0_i32, %c0_i32_0 : i32, i32
  }
  func.func @transform_4(%arg0: i32, %arg1: i32) -> (i32, i32) {
    %c0_i32 = arith.constant 0 : i32
    %c0_i32_0 = arith.constant 0 : i32
    %c0_i32_1 = arith.constant 0 : i32
    return %c0_i32, %c0_i32_0 : i32, i32
  }
  func.func @transform_5(%arg0: i32, %arg1: i32) -> (i32, i32) {
    %c0_i32 = arith.constant 0 : i32
    %c0_i32_0 = arith.constant 0 : i32
    %c0_i32_1 = arith.constant 0 : i32
    return %c0_i32, %c0_i32_0 : i32, i32
  }
  func.func @transform_6(%arg0: i32, %arg1: i32) -> (i32, i32, i32) {
    %c0_i32 = arith.constant 0 : i32
    %c0_i32_0 = arith.constant 0 : i32
    %c0_i32_1 = arith.constant 0 : i32
    return %arg1, %c0_i32, %c0_i32_0 : i32, i32, i32
  }
  func.func @transform_7(%arg0: i32, %arg1: i32) -> (i32, i32, i32) {
    %c0_i32 = arith.constant 0 : i32
    %c0_i32_0 = arith.constant 0 : i32
    %c0_i32_1 = arith.constant 0 : i32
    return %arg1, %c0_i32, %c0_i32_0 : i32, i32, i32
  }
  func.func @transform_8(%arg0: i32, %arg1: i32) -> (i32, i32, i32) {
    %c0_i32 = arith.constant 0 : i32
    %c0_i32_0 = arith.constant 0 : i32
    %c0_i32_1 = arith.constant 0 : i32
    return %arg1, %c0_i32, %c0_i32_0 : i32, i32, i32
  }
  func.func @transform_9(%arg0: i32, %arg1: i32) -> (i32, i32, i32) {
    %c0_i32 = arith.constant 0 : i32
    %c0_i32_0 = arith.constant 0 : i32
    %c0_i32_1 = arith.constant 0 : i32
    return %arg1, %c0_i32, %c0_i32_0 : i32, i32, i32
  }
  func.func @transform_10(%arg0: i32, %arg1: i32) -> (i32, i32, i32) {
    %c0_i32 = arith.constant 0 : i32
    %c0_i32_0 = arith.constant 0 : i32
    %c0_i32_1 = arith.constant 0 : i32
    return %arg1, %c0_i32, %c0_i32_0 : i32, i32, i32
  }
  func.func @transform_11(%arg0: i32, %arg1: i32) -> (i32, i32, i32) {
    %c0_i32 = arith.constant 0 : i32
    %c0_i32_0 = arith.constant 0 : i32
    %c0_i32_1 = arith.constant 0 : i32
    return %arg1, %c0_i32, %c0_i32_0 : i32, i32, i32
  }
  func.func @transform_12(%arg0: i32, %arg1: i32) -> (i32, i32, i32) {
    %c0_i32 = arith.constant 0 : i32
    %c0_i32_0 = arith.constant 0 : i32
    %c0_i32_1 = arith.constant 0 : i32
    return %arg1, %c0_i32, %c0_i32_0 : i32, i32, i32
  }
  func.func @transform_13(%arg0: i32, %arg1: i32) -> (i32, i32, i32) {
    %c0_i32 = arith.constant 0 : i32
    %c0_i32_0 = arith.constant 0 : i32
    %c0_i32_1 = arith.constant 0 : i32
    return %arg1, %c0_i32, %c0_i32_0 : i32, i32, i32
  }
  func.func @transform_14(%arg0: i32, %arg1: i32) -> (i32, i32, i32) {
    %c0_i32 = arith.constant 0 : i32
    %c0_i32_0 = arith.constant 0 : i32
    %c0_i32_1 = arith.constant 0 : i32
    return %arg1, %c0_i32, %c0_i32_0 : i32, i32, i32
  }
  func.func @transform_15(%arg0: i32, %arg1: i32) -> (i32, i32, i32) {
    %c0_i32 = arith.constant 0 : i32
    %c0_i32_0 = arith.constant 0 : i32
    %c0_i32_1 = arith.constant 0 : i32
    return %arg1, %c0_i32, %c0_i32_0 : i32, i32, i32
  }
  func.func @transform_16(%arg0: i32, %arg1: i32) -> (i32, i32, i32) {
    %c0_i32 = arith.constant 0 : i32
    %c0_i32_0 = arith.constant 0 : i32
    %c0_i32_1 = arith.constant 0 : i32
    return %arg1, %c0_i32, %c0_i32_0 : i32, i32, i32
  }
  func.func @transform_17(%arg0: i32, %arg1: i32) -> (i32, i32, i32) {
    %c0_i32 = arith.constant 0 : i32
    %c0_i32_0 = arith.constant 0 : i32
    %c0_i32_1 = arith.constant 0 : i32
    return %arg1, %c0_i32, %c0_i32_0 : i32, i32, i32
  }
  func.func @transform_18(%arg0: i32, %arg1: i32) -> (i32, i32) {
    %c0_i32 = arith.constant 0 : i32
    %c0_i32_0 = arith.constant 0 : i32
    %c0_i32_1 = arith.constant 0 : i32
    return %c0_i32, %c0_i32_0 : i32, i32
  }
  func.func @transform_19(%arg0: i32, %arg1: i32) -> (i32, i32) {
    %c0_i32 = arith.constant 0 : i32
    %c0_i32_0 = arith.constant 0 : i32
    %c0_i32_1 = arith.constant 0 : i32
    return %c0_i32, %c0_i32_0 : i32, i32
  }
  func.func @transform_20(%arg0: i32, %arg1: i32) -> (i32, i32, i32) {
    %c0_i32 = arith.constant 0 : i32
    %c0_i32_0 = arith.constant 0 : i32
    %c0_i32_1 = arith.constant 0 : i32
    return %arg0, %c0_i32, %c0_i32_0 : i32, i32, i32
  }
}

</mosaic_0001>

<llo_original>
// kernel: tpu_custom_call.1
$region0: #{tpu_custom_call.1}
  #allocation0 [shape = 'u32[]', space=smem, size = 0x4, offset = 0x4, fixed_abs, tag = 'smem constant byte address 0x4 - core index']
  #allocation1 [shape = 'u32[144,128]{1,0:T(1,128)}', space=vmem, size = 0x12000, scoped, tag = 'internal scratch']
  #allocation2 [shape = 'f32[16,32]{1,0:T(8,128)}', space=vmem, size = 0x2000, scoped, tag = 'scratch operand']
  #allocation3 [shape = 'bf16[16,32]{1,0:T(8,128)(2,1)}', space=vmem, size = 0x1000, scoped, tag = 'scratch operand']
  %s0 = inlined_call_operand.vmem [shape: f32[2,16,48], index: 0, kind: input, shape index: {}]
  %s1 = inlined_call_operand.vmem [shape: f32[2,16,32], index: 1, kind: input, shape index: {}]
  %s2 = inlined_call_operand.vmem [shape: f32[1,16], index: 2, kind: input, shape index: {}]
  %s3 = inlined_call_operand.vmem [shape: bf16[48,32], index: 3, kind: input, shape index: {}]
  %s4 = inlined_call_operand.vmem [shape: f32[1,32], index: 4, kind: input, shape index: {}]
  %s5 = inlined_call_operand.vmem [shape: f32[1,32], index: 5, kind: input, shape index: {}]
  %s6 = inlined_call_operand.vmem [shape: f32[2,1,32], index: 6, kind: input, shape index: {}]
  %s7 = inlined_call_operand.vmem [shape: f32[2,1,32], index: 7, kind: input, shape index: {}]
  %s8 = inlined_call_operand.vmem [shape: bf16[2,32,96], index: 8, kind: input, shape index: {}]
  %s9 = inlined_call_operand.vmem [shape: f32[2,1,96], index: 9, kind: input, shape index: {}]
  %s10 = inlined_call_operand.vmem [shape: bf16[2,32,32], index: 10, kind: input, shape index: {}]
  %s11 = inlined_call_operand.vmem [shape: f32[2,1,32], index: 11, kind: input, shape index: {}]
  %s12 = inlined_call_operand.vmem [shape: f32[2,1,32], index: 12, kind: input, shape index: {}]
  %s13 = inlined_call_operand.vmem [shape: f32[2,1,32], index: 13, kind: input, shape index: {}]
  %s14 = inlined_call_operand.vmem [shape: bf16[2,32,128], index: 14, kind: input, shape index: {}]
  %s15 = inlined_call_operand.vmem [shape: f32[2,1,128], index: 15, kind: input, shape index: {}]
  %s16 = inlined_call_operand.vmem [shape: bf16[2,128,32], index: 16, kind: input, shape index: {}]
  %s17 = inlined_call_operand.vmem [shape: f32[2,1,32], index: 17, kind: input, shape index: {}]
  %s18 = inlined_call_operand.vmem [shape: f32[1,32], index: 18, kind: input, shape index: {}]
  %s19 = inlined_call_operand.vmem [shape: f32[1,32], index: 19, kind: input, shape index: {}]
  %s20 = inlined_call_operand.hbm [shape: f32[2,16,32], index: 20, kind: output, shape index: {}]
  %s21 = sld [smem:[#allocation0]]
  $region121: #{tpu_custom_call.1} parent=0
    _
  %s23 = ssub.s32 1, %s21
  %s24 = scalar_select 0, %s23, %s21
  $region1: #{tpu_custom_call.1} parent=0
    #allocation4 [shape = 'u8[16384]{0}', space=vmem, size = 0x4000, scoped, tag = 'output window, operand 0']
    #allocation5 [shape = 's32[2]{0}', space=sflag, size = 0x8, scoped, tag = 'scoped memory for tpu_custom_call.1']
    %25 = vsyncpa [#allocation5], 0
    %s26 = scalar_lea.sflag [#allocation5], 1
    %27 = vsyncpa %s26, 0
    loop: start=0, step=1, limit=6
    $region2: #{tpu_custom_call.1} parent=1 // loop_pre_header
      _
    $region3: #{tpu_custom_call.1} parent=1 // loop_header
      %s29 = sphi 0, %s33
      %p30 = scmp.ge.s32.totalorder %s29, 6
      %s36 = sphi 0, %s48
      %s37 = sphi 0, %s44
      %s38 = sphi 0, %s36
      %s39 = sphi 0, %s37
      %s40 = sphi 0, %s38
      %s41 = sphi 0, %s39
      %s51 = sphi 0, %s53
      %s54 = sphi 0, %s51
      %s55 = sphi 0, %s54
      %s71 = sphi 0, %s55
      %s77 = sphi 0, %s79
      %s80 = sphi 0, %s77
      %s81 = sphi 0, %s80
      %s97 = sphi 0, %s81
      %s101 = sphi 0, %s101
      %s103 = sphi 0, %s101
      %s104 = sphi 0, %s103
      %s118 = sphi 0, %s104
      %s122 = sphi 0, %s122
      %s124 = sphi 0, %s122
      %s125 = sphi 0, %s124
      %s139 = sphi 0, %s125
      %s143 = sphi 0, %s143
      %s145 = sphi 0, %s143
      %s146 = sphi 0, %s145
      %s160 = sphi 0, %s146
      %s164 = sphi 0, %s164
      %s166 = sphi 0, %s164
      %s167 = sphi 0, %s166
      %s181 = sphi 0, %s167
      %s187 = sphi 0, %s189
      %s190 = sphi 0, %s187
      %s191 = sphi 0, %s190
      %s207 = sphi 0, %s191
      %s213 = sphi 0, %s215
      %s216 = sphi 0, %s213
      %s217 = sphi 0, %s216
      %s233 = sphi 0, %s217
      %s239 = sphi 0, %s241
      %s242 = sphi 0, %s239
      %s243 = sphi 0, %s242
      %s259 = sphi 0, %s243
      %s265 = sphi 0, %s267
      %s268 = sphi 0, %s265
      %s269 = sphi 0, %s268
      %s285 = sphi 0, %s269
      %s291 = sphi 0, %s293
      %s294 = sphi 0, %s291
      %s295 = sphi 0, %s294
      %s311 = sphi 0, %s295
      %s317 = sphi 0, %s319
      %s320 = sphi 0, %s317
      %s321 = sphi 0, %s320
      %s337 = sphi 0, %s321
      %s343 = sphi 0, %s345
      %s346 = sphi 0, %s343
      %s347 = sphi 0, %s346
      %s363 = sphi 0, %s347
      %s369 = sphi 0, %s371
      %s372 = sphi 0, %s369
      %s373 = sphi 0, %s372
      %s389 = sphi 0, %s373
      %s395 = sphi 0, %s397
      %s398 = sphi 0, %s395
      %s399 = sphi 0, %s398
      %s415 = sphi 0, %s399
      %s421 = sphi 0, %s423
      %s424 = sphi 0, %s421
      %s425 = sphi 0, %s424
      %s441 = sphi 0, %s425
      %s447 = sphi 0, %s449
      %s450 = sphi 0, %s447
      %s451 = sphi 0, %s450
      %s467 = sphi 0, %s451
      %s473 = sphi 0, %s475
      %s476 = sphi 0, %s473
      %s477 = sphi 0, %s476
      %s493 = sphi 0, %s477
      %s497 = sphi 0, %s497
      %s499 = sphi 0, %s497
      %s500 = sphi 0, %s499
      %s514 = sphi 0, %s500
      %s518 = sphi 0, %s518
      %s520 = sphi 0, %s518
      %s521 = sphi 0, %s520
      %s535 = sphi 0, %s521
      %s541 = sphi 0, %s543
      %s544 = sphi 0, %s541
      %s545 = sphi 0, %s544
      %s561 = sphi 0, %s545
    $region4: #{tpu_custom_call.1} parent=1 // loop_header_branch
      %32 = sbr.rel (%p30) target = $region8
    $region5: #{tpu_custom_call.1} parent=1 // loop_body
      %s34 = ssub.s32 %s29, 1
      %s35 = ssub.s32 %s29, 2
      %s42 = sadd.s32 1, %s37
      %p43 = scmp.ge.s32.totalorder %s42, 2
      %s44 = scalar_select %p43, 0, %s42
      %s45 = sadd.s32 1, %s36
      %s46 = scalar_select %p43, %s45, %s36
      %p47 = scmp.ge.s32.totalorder %s46, 2
      %s48 = scalar_select %p47, 0, %s46
      %s49 = ssub.s32 %s36, %s48
      %p50 = scmp.eq.s32.totalorder %s49, 0
      %s52 = sadd.s32 %s51, 1
      %s53 = scalar_select %p50, %s51, %s52
      %p56 = pneg %p50
      %p57 = scmp.eq.s32.totalorder %s29, 3
      %p58 = por %p56, %p57
      %p59 = scmp.ne.s32.totalorder %s51, %s54
      %p60 = scmp.eq.s32.totalorder %s29, 0
      %p61 = por %p59, %p60
      %p62 = scmp.ne.s32.totalorder %s51, %s54
      %p63 = scmp.eq.s32.totalorder %s34, 3
      %p64 = por %p62, %p63
      %p65 = scmp.ne.s32.totalorder %s54, %s55
      %p66 = scmp.eq.s32.totalorder %s34, 0
      %p67 = por %p65, %p66
      %p68 = scmp.ne.s32.totalorder %s54, %s55
      %p69 = scmp.eq.s32.totalorder %s35, 3
      %p70 = por %p68, %p69
      %p72 = scmp.ne.s32.totalorder %s55, %s71
      %p73 = scmp.eq.s32.totalorder %s35, 0
      %p74 = por %p72, %p73
      %s75 = ssub.s32 %s36, %s48
      %p76 = scmp.eq.s32.totalorder %s75, 0
      %s78 = sadd.s32 %s77, 1
      %s79 = scalar_select %p76, %s77, %s78
      %p82 = pneg %p76
      %p83 = scmp.eq.s32.totalorder %s29, 3
      %p84 = por %p82, %p83
      %p85 = scmp.ne.s32.totalorder %s77, %s80
      %p86 = scmp.eq.s32.totalorder %s29, 0
      %p87 = por %p85, %p86
      %p88 = scmp.ne.s32.totalorder %s77, %s80
      %p89 = scmp.eq.s32.totalorder %s34, 3
      %p90 = por %p88, %p89
      %p91 = scmp.ne.s32.totalorder %s80, %s81
      %p92 = scmp.eq.s32.totalorder %s34, 0
      %p93 = por %p91, %p92
      %p94 = scmp.ne.s32.totalorder %s80, %s81
      %p95 = scmp.eq.s32.totalorder %s35, 3
      %p96 = por %p94, %p95
      %p98 = scmp.ne.s32.totalorder %s81, %s97
      %p99 = scmp.eq.s32.totalorder %s35, 0
      %p100 = por %p98, %p99
      %s102 = sadd.s32 %s101, 1
      %p105 = scmp.eq.s32.totalorder %s29, 3
      %p106 = scmp.ne.s32.totalorder %s101, %s103
      %p107 = scmp.eq.s32.totalorder %s29, 0
      %p108 = por %p106, %p107
      %p109 = scmp.ne.s32.totalorder %s101, %s103
      %p110 = scmp.eq.s32.totalorder %s34, 3
      %p111 = por %p109, %p110
      %p112 = scmp.ne.s32.totalorder %s103, %s104
      %p113 = scmp.eq.s32.totalorder %s34, 0
      %p114 = por %p112, %p113
      %p115 = scmp.ne.s32.totalorder %s103, %s104
      %p116 = scmp.eq.s32.totalorder %s35, 3
      %p117 = por %p115, %p116
      %p119 = scmp.ne.s32.totalorder %s104, %s118
      %p120 = scmp.eq.s32.totalorder %s35, 0
      %p121 = por %p119, %p120
      %s123 = sadd.s32 %s122, 1
      %p126 = scmp.eq.s32.totalorder %s29, 3
      %p127 = scmp.ne.s32.totalorder %s122, %s124
      %p128 = scmp.eq.s32.totalorder %s29, 0
      %p129 = por %p127, %p128
      %p130 = scmp.ne.s32.totalorder %s122, %s124
      %p131 = scmp.eq.s32.totalorder %s34, 3
      %p132 = por %p130, %p131
      %p133 = scmp.ne.s32.totalorder %s124, %s125
      %p134 = scmp.eq.s32.totalorder %s34, 0
      %p135 = por %p133, %p134
      %p136 = scmp.ne.s32.totalorder %s124, %s125
      %p137 = scmp.eq.s32.totalorder %s35, 3
      %p138 = por %p136, %p137
      %p140 = scmp.ne.s32.totalorder %s125, %s139
      %p141 = scmp.eq.s32.totalorder %s35, 0
      %p142 = por %p140, %p141
      %s144 = sadd.s32 %s143, 1
      %p147 = scmp.eq.s32.totalorder %s29, 3
      %p148 = scmp.ne.s32.totalorder %s143, %s145
      %p149 = scmp.eq.s32.totalorder %s29, 0
      %p150 = por %p148, %p149
      %p151 = scmp.ne.s32.totalorder %s143, %s145
      %p152 = scmp.eq.s32.totalorder %s34, 3
      %p153 = por %p151, %p152
      %p154 = scmp.ne.s32.totalorder %s145, %s146
      %p155 = scmp.eq.s32.totalorder %s34, 0
      %p156 = por %p154, %p155
      %p157 = scmp.ne.s32.totalorder %s145, %s146
      %p158 = scmp.eq.s32.totalorder %s35, 3
      %p159 = por %p157, %p158
      %p161 = scmp.ne.s32.totalorder %s146, %s160
      %p162 = scmp.eq.s32.totalorder %s35, 0
      %p163 = por %p161, %p162
      %s165 = sadd.s32 %s164, 1
      %p168 = scmp.eq.s32.totalorder %s29, 3
      %p169 = scmp.ne.s32.totalorder %s164, %s166
      %p170 = scmp.eq.s32.totalorder %s29, 0
      %p171 = por %p169, %p170
      %p172 = scmp.ne.s32.totalorder %s164, %s166
      %p173 = scmp.eq.s32.totalorder %s34, 3
      %p174 = por %p172, %p173
      %p175 = scmp.ne.s32.totalorder %s166, %s167
      %p176 = scmp.eq.s32.totalorder %s34, 0
      %p177 = por %p175, %p176
      %p178 = scmp.ne.s32.totalorder %s166, %s167
      %p179 = scmp.eq.s32.totalorder %s35, 3
      %p180 = por %p178, %p179
      %p182 = scmp.ne.s32.totalorder %s167, %s181
      %p183 = scmp.eq.s32.totalorder %s35, 0
      %p184 = por %p182, %p183
      %s185 = ssub.s32 %s37, %s44
      %p186 = scmp.eq.s32.totalorder %s185, 0
      %s188 = sadd.s32 %s187, 1
      %s189 = scalar_select %p186, %s187, %s188
      %p192 = pneg %p186
      %p193 = scmp.eq.s32.totalorder %s29, 3
      %p194 = por %p192, %p193
      %p195 = scmp.ne.s32.totalorder %s187, %s190
      %p196 = scmp.eq.s32.totalorder %s29, 0
      %p197 = por %p195, %p196
      %p198 = scmp.ne.s32.totalorder %s187, %s190
      %p199 = scmp.eq.s32.totalorder %s34, 3
      %p200 = por %p198, %p199
      %p201 = scmp.ne.s32.totalorder %s190, %s191
      %p202 = scmp.eq.s32.totalorder %s34, 0
      %p203 = por %p201, %p202
      %p204 = scmp.ne.s32.totalorder %s190, %s191
      %p205 = scmp.eq.s32.totalorder %s35, 3
      %p206 = por %p204, %p205
      %p208 = scmp.ne.s32.totalorder %s191, %s207
      %p209 = scmp.eq.s32.totalorder %s35, 0
      %p210 = por %p208, %p209
      %s211 = ssub.s32 %s37, %s44
      %p212 = scmp.eq.s32.totalorder %s211, 0
      %s214 = sadd.s32 %s213, 1
      %s215 = scalar_select %p212, %s213, %s214
      %p218 = pneg %p212
      %p219 = scmp.eq.s32.totalorder %s29, 3
      %p220 = por %p218, %p219
      %p221 = scmp.ne.s32.totalorder %s213, %s216
      %p222 = scmp.eq.s32.totalorder %s29, 0
      %p223 = por %p221, %p222
      %p224 = scmp.ne.s32.totalorder %s213, %s216
      %p225 = scmp.eq.s32.totalorder %s34, 3
      %p226 = por %p224, %p225
      %p227 = scmp.ne.s32.totalorder %s216, %s217
      %p228 = scmp.eq.s32.totalorder %s34, 0
      %p229 = por %p227, %p228
      %p230 = scmp.ne.s32.totalorder %s216, %s217
      %p231 = scmp.eq.s32.totalorder %s35, 3
      %p232 = por %p230, %p231
      %p234 = scmp.ne.s32.totalorder %s217, %s233
      %p235 = scmp.eq.s32.totalorder %s35, 0
      %p236 = por %p234, %p235
      %s237 = ssub.s32 %s37, %s44
      %p238 = scmp.eq.s32.totalorder %s237, 0
      %s240 = sadd.s32 %s239, 1
      %s241 = scalar_select %p238, %s239, %s240
      %p244 = pneg %p238
      %p245 = scmp.eq.s32.totalorder %s29, 3
      %p246 = por %p244, %p245
      %p247 = scmp.ne.s32.totalorder %s239, %s242
      %p248 = scmp.eq.s32.totalorder %s29, 0
      %p249 = por %p247, %p248
      %p250 = scmp.ne.s32.totalorder %s239, %s242
      %p251 = scmp.eq.s32.totalorder %s34, 3
      %p252 = por %p250, %p251
      %p253 = scmp.ne.s32.totalorder %s242, %s243
      %p254 = scmp.eq.s32.totalorder %s34, 0
      %p255 = por %p253, %p254
      %p256 = scmp.ne.s32.totalorder %s242, %s243
      %p257 = scmp.eq.s32.totalorder %s35, 3
      %p258 = por %p256, %p257
      %p260 = scmp.ne.s32.totalorder %s243, %s259
      %p261 = scmp.eq.s32.totalorder %s35, 0
      %p262 = por %p260, %p261
      %s263 = ssub.s32 %s37, %s44
      %p264 = scmp.eq.s32.totalorder %s263, 0
      %s266 = sadd.s32 %s265, 1
      %s267 = scalar_select %p264, %s265, %s266
      %p270 = pneg %p264
      %p271 = scmp.eq.s32.totalorder %s29, 3
      %p272 = por %p270, %p271
      %p273 = scmp.ne.s32.totalorder %s265, %s268
      %p274 = scmp.eq.s32.totalorder %s29, 0
      %p275 = por %p273, %p274
      %p276 = scmp.ne.s32.totalorder %s265, %s268
      %p277 = scmp.eq.s32.totalorder %s34, 3
      %p278 = por %p276, %p277
      %p279 = scmp.ne.s32.totalorder %s268, %s269
      %p280 = scmp.eq.s32.totalorder %s34, 0
      %p281 = por %p279, %p280
      %p282 = scmp.ne.s32.totalorder %s268, %s269
      %p283 = scmp.eq.s32.totalorder %s35, 3
      %p284 = por %p282, %p283
      %p286 = scmp.ne.s32.totalorder %s269, %s285
      %p287 = scmp.eq.s32.totalorder %s35, 0
      %p288 = por %p286, %p287
      %s289 = ssub.s32 %s37, %s44
      %p290 = scmp.eq.s32.totalorder %s289, 0
      %s292 = sadd.s32 %s291, 1
      %s293 = scalar_select %p290, %s291, %s292
      %p296 = pneg %p290
      %p297 = scmp.eq.s32.totalorder %s29, 3
      %p298 = por %p296, %p297
      %p299 = scmp.ne.s32.totalorder %s291, %s294
      %p300 = scmp.eq.s32.totalorder %s29, 0
      %p301 = por %p299, %p300
      %p302 = scmp.ne.s32.totalorder %s291, %s294
      %p303 = scmp.eq.s32.totalorder %s34, 3
      %p304 = por %p302, %p303
      %p305 = scmp.ne.s32.totalorder %s294, %s295
      %p306 = scmp.eq.s32.totalorder %s34, 0
      %p307 = por %p305, %p306
      %p308 = scmp.ne.s32.totalorder %s294, %s295
      %p309 = scmp.eq.s32.totalorder %s35, 3
      %p310 = por %p308, %p309
      %p312 = scmp.ne.s32.totalorder %s295, %s311
      %p313 = scmp.eq.s32.totalorder %s35, 0
      %p314 = por %p312, %p313
      %s315 = ssub.s32 %s37, %s44
      %p316 = scmp.eq.s32.totalorder %s315, 0
      %s318 = sadd.s32 %s317, 1
      %s319 = scalar_select %p316, %s317, %s318
      %p322 = pneg %p316
      %p323 = scmp.eq.s32.totalorder %s29, 3
      %p324 = por %p322, %p323
      %p325 = scmp.ne.s32.totalorder %s317, %s320
      %p326 = scmp.eq.s32.totalorder %s29, 0
      %p327 = por %p325, %p326
      %p328 = scmp.ne.s32.totalorder %s317, %s320
      %p329 = scmp.eq.s32.totalorder %s34, 3
      %p330 = por %p328, %p329
      %p331 = scmp.ne.s32.totalorder %s320, %s321
      %p332 = scmp.eq.s32.totalorder %s34, 0
      %p333 = por %p331, %p332
      %p334 = scmp.ne.s32.totalorder %s320, %s321
      %p335 = scmp.eq.s32.totalorder %s35, 3
      %p336 = por %p334, %p335
      %p338 = scmp.ne.s32.totalorder %s321, %s337
      %p339 = scmp.eq.s32.totalorder %s35, 0
      %p340 = por %p338, %p339
      %s341 = ssub.s32 %s37, %s44
      %p342 = scmp.eq.s32.totalorder %s341, 0
      %s344 = sadd.s32 %s343, 1
      %s345 = scalar_select %p342, %s343, %s344
      %p348 = pneg %p342
      %p349 = scmp.eq.s32.totalorder %s29, 3
      %p350 = por %p348, %p349
      %p351 = scmp.ne.s32.totalorder %s343, %s346
      %p352 = scmp.eq.s32.totalorder %s29, 0
      %p353 = por %p351, %p352
      %p354 = scmp.ne.s32.totalorder %s343, %s346
      %p355 = scmp.eq.s32.totalorder %s34, 3
      %p356 = por %p354, %p355
      %p357 = scmp.ne.s32.totalorder %s346, %s347
      %p358 = scmp.eq.s32.totalorder %s34, 0
      %p359 = por %p357, %p358
      %p360 = scmp.ne.s32.totalorder %s346, %s347
      %p361 = scmp.eq.s32.totalorder %s35, 3
      %p362 = por %p360, %p361
      %p364 = scmp.ne.s32.totalorder %s347, %s363
      %p365 = scmp.eq.s32.totalorder %s35, 0
      %p366 = por %p364, %p365
      %s367 = ssub.s32 %s37, %s44
      %p368 = scmp.eq.s32.totalorder %s367, 0
      %s370 = sadd.s32 %s369, 1
      %s371 = scalar_select %p368, %s369, %s370
      %p374 = pneg %p368
      %p375 = scmp.eq.s32.totalorder %s29, 3
      %p376 = por %p374, %p375
      %p377 = scmp.ne.s32.totalorder %s369, %s372
      %p378 = scmp.eq.s32.totalorder %s29, 0
      %p379 = por %p377, %p378
      %p380 = scmp.ne.s32.totalorder %s369, %s372
      %p381 = scmp.eq.s32.totalorder %s34, 3
      %p382 = por %p380, %p381
      %p383 = scmp.ne.s32.totalorder %s372, %s373
      %p384 = scmp.eq.s32.totalorder %s34, 0
      %p385 = por %p383, %p384
      %p386 = scmp.ne.s32.totalorder %s372, %s373
      %p387 = scmp.eq.s32.totalorder %s35, 3
      %p388 = por %p386, %p387
      %p390 = scmp.ne.s32.totalorder %s373, %s389
      %p391 = scmp.eq.s32.totalorder %s35, 0
      %p392 = por %p390, %p391
      %s393 = ssub.s32 %s37, %s44
      %p394 = scmp.eq.s32.totalorder %s393, 0
      %s396 = sadd.s32 %s395, 1
      %s397 = scalar_select %p394, %s395, %s396
      %p400 = pneg %p394
      %p401 = scmp.eq.s32.totalorder %s29, 3
      %p402 = por %p400, %p401
      %p403 = scmp.ne.s32.totalorder %s395, %s398
      %p404 = scmp.eq.s32.totalorder %s29, 0
      %p405 = por %p403, %p404
      %p406 = scmp.ne.s32.totalorder %s395, %s398
      %p407 = scmp.eq.s32.totalorder %s34, 3
      %p408 = por %p406, %p407
      %p409 = scmp.ne.s32.totalorder %s398, %s399
      %p410 = scmp.eq.s32.totalorder %s34, 0
      %p411 = por %p409, %p410
      %p412 = scmp.ne.s32.totalorder %s398, %s399
      %p413 = scmp.eq.s32.totalorder %s35, 3
      %p414 = por %p412, %p413
      %p416 = scmp.ne.s32.totalorder %s399, %s415
      %p417 = scmp.eq.s32.totalorder %s35, 0
      %p418 = por %p416, %p417
      %s419 = ssub.s32 %s37, %s44
      %p420 = scmp.eq.s32.totalorder %s419, 0
      %s422 = sadd.s32 %s421, 1
      %s423 = scalar_select %p420, %s421, %s422
      %p426 = pneg %p420
      %p427 = scmp.eq.s32.totalorder %s29, 3
      %p428 = por %p426, %p427
      %p429 = scmp.ne.s32.totalorder %s421, %s424
      %p430 = scmp.eq.s32.totalorder %s29, 0
      %p431 = por %p429, %p430
      %p432 = scmp.ne.s32.totalorder %s421, %s424
      %p433 = scmp.eq.s32.totalorder %s34, 3
      %p434 = por %p432, %p433
      %p435 = scmp.ne.s32.totalorder %s424, %s425
      %p436 = scmp.eq.s32.totalorder %s34, 0
      %p437 = por %p435, %p436
      %p438 = scmp.ne.s32.totalorder %s424, %s425
      %p439 = scmp.eq.s32.totalorder %s35, 3
      %p440 = por %p438, %p439
      %p442 = scmp.ne.s32.totalorder %s425, %s441
      %p443 = scmp.eq.s32.totalorder %s35, 0
      %p444 = por %p442, %p443
      %s445 = ssub.s32 %s37, %s44
      %p446 = scmp.eq.s32.totalorder %s445, 0
      %s448 = sadd.s32 %s447, 1
      %s449 = scalar_select %p446, %s447, %s448
      %p452 = pneg %p446
      %p453 = scmp.eq.s32.totalorder %s29, 3
      %p454 = por %p452, %p453
      %p455 = scmp.ne.s32.totalorder %s447, %s450
      %p456 = scmp.eq.s32.totalorder %s29, 0
      %p457 = por %p455, %p456
      %p458 = scmp.ne.s32.totalorder %s447, %s450
      %p459 = scmp.eq.s32.totalorder %s34, 3
      %p460 = por %p458, %p459
      %p461 = scmp.ne.s32.totalorder %s450, %s451
      %p462 = scmp.eq.s32.totalorder %s34, 0
      %p463 = por %p461, %p462
      %p464 = scmp.ne.s32.totalorder %s450, %s451
      %p465 = scmp.eq.s32.totalorder %s35, 3
      %p466 = por %p464, %p465
      %p468 = scmp.ne.s32.totalorder %s451, %s467
      %p469 = scmp.eq.s32.totalorder %s35, 0
      %p470 = por %p468, %p469
      %s471 = ssub.s32 %s37, %s44
      %p472 = scmp.eq.s32.totalorder %s471, 0
      %s474 = sadd.s32 %s473, 1
      %s475 = scalar_select %p472, %s473, %s474
      %p478 = pneg %p472
      %p479 = scmp.eq.s32.totalorder %s29, 3
      %p480 = por %p478, %p479
      %p481 = scmp.ne.s32.totalorder %s473, %s476
      %p482 = scmp.eq.s32.totalorder %s29, 0
      %p483 = por %p481, %p482
      %p484 = scmp.ne.s32.totalorder %s473, %s476
      %p485 = scmp.eq.s32.totalorder %s34, 3
      %p486 = por %p484, %p485
      %p487 = scmp.ne.s32.totalorder %s476, %s477
      %p488 = scmp.eq.s32.totalorder %s34, 0
      %p489 = por %p487, %p488
      %p490 = scmp.ne.s32.totalorder %s476, %s477
      %p491 = scmp.eq.s32.totalorder %s35, 3
      %p492 = por %p490, %p491
      %p494 = scmp.ne.s32.totalorder %s477, %s493
      %p495 = scmp.eq.s32.totalorder %s35, 0
      %p496 = por %p494, %p495
      %s498 = sadd.s32 %s497, 1
      %p501 = scmp.eq.s32.totalorder %s29, 3
      %p502 = scmp.ne.s32.totalorder %s497, %s499
      %p503 = scmp.eq.s32.totalorder %s29, 0
      %p504 = por %p502, %p503
      %p505 = scmp.ne.s32.totalorder %s497, %s499
      %p506 = scmp.eq.s32.totalorder %s34, 3
      %p507 = por %p505, %p506
      %p508 = scmp.ne.s32.totalorder %s499, %s500
      %p509 = scmp.eq.s32.totalorder %s34, 0
      %p510 = por %p508, %p509
      %p511 = scmp.ne.s32.totalorder %s499, %s500
      %p512 = scmp.eq.s32.totalorder %s35, 3
      %p513 = por %p511, %p512
      %p515 = scmp.ne.s32.totalorder %s500, %s514
      %p516 = scmp.eq.s32.totalorder %s35, 0
      %p517 = por %p515, %p516
      %s519 = sadd.s32 %s518, 1
      %p522 = scmp.eq.s32.totalorder %s29, 3
      %p523 = scmp.ne.s32.totalorder %s518, %s520
      %p524 = scmp.eq.s32.totalorder %s29, 0
      %p525 = por %p523, %p524
      %p526 = scmp.ne.s32.totalorder %s518, %s520
      %p527 = scmp.eq.s32.totalorder %s34, 3
      %p528 = por %p526, %p527
      %p529 = scmp.ne.s32.totalorder %s520, %s521
      %p530 = scmp.eq.s32.totalorder %s34, 0
      %p531 = por %p529, %p530
      %p532 = scmp.ne.s32.totalorder %s520, %s521
      %p533 = scmp.eq.s32.totalorder %s35, 3
      %p534 = por %p532, %p533
      %p536 = scmp.ne.s32.totalorder %s521, %s535
      %p537 = scmp.eq.s32.totalorder %s35, 0
      %p538 = por %p536, %p537
      %s539 = ssub.s32 %s36, %s48
      %p540 = scmp.eq.s32.totalorder %s539, 0
      %s542 = sadd.s32 %s541, 1
      %s543 = scalar_select %p540, %s541, %s542
      %p546 = pneg %p540
      %p547 = scmp.eq.s32.totalorder %s29, 3
      %p548 = por %p546, %p547
      %p549 = scmp.ne.s32.totalorder %s541, %s544
      %p550 = scmp.eq.s32.totalorder %s29, 0
      %p551 = por %p549, %p550
      %p552 = scmp.ne.s32.totalorder %s541, %s544
      %p553 = scmp.eq.s32.totalorder %s34, 3
      %p554 = por %p552, %p553
      %p555 = scmp.ne.s32.totalorder %s544, %s545
      %p556 = scmp.eq.s32.totalorder %s34, 0
      %p557 = por %p555, %p556
      %p558 = scmp.ne.s32.totalorder %s544, %s545
      %p559 = scmp.eq.s32.totalorder %s35, 3
      %p560 = por %p558, %p559
      %p562 = scmp.ne.s32.totalorder %s545, %s561
      %p563 = scmp.eq.s32.totalorder %s35, 0
      %p564 = por %p562, %p563
      %p565 = scmp.le.s32.totalorder 1, %s29
      %p566 = scmp.lt.s32.totalorder %s29, 5
      %p567 = pnand %p565, %p566
      %p568 = pneg %p567
      // Predicated region
      $region9: #{tpu_custom_call.1} parent=5 // pred_check
        _
      $region10: #{tpu_custom_call.1} parent=5 // pred_check_branch
        %570 = sbr.rel (%p567) target = $region12
      $region11: #{tpu_custom_call.1} parent=5 // pred_region
        %s571 = ssub.s32 %s29, 1
        // Predicated region
        $region13: #{tpu_custom_call.1} parent=11 // pred_check
          %p572 = pneg %p114
        $region14: #{tpu_custom_call.1} parent=11 // pred_check_branch
          %574 = sbr.rel (%p572) target = $region16
        $region15: #{tpu_custom_call.1} parent=11 // pred_region
          _
        $region16: #{tpu_custom_call.1} parent=11 // pred_fallthru
          _
        // Predicated region
        $region17: #{tpu_custom_call.1} parent=11 // pred_check
          %p575 = pneg %p135
        $region18: #{tpu_custom_call.1} parent=11 // pred_check_branch
          %577 = sbr.rel (%p575) target = $region20
        $region19: #{tpu_custom_call.1} parent=11 // pred_region
          _
        $region20: #{tpu_custom_call.1} parent=11 // pred_fallthru
          _
        // Predicated region
        $region21: #{tpu_custom_call.1} parent=11 // pred_check
          %p578 = pneg %p156
        $region22: #{tpu_custom_call.1} parent=11 // pred_check_branch
          %580 = sbr.rel (%p578) target = $region24
        $region23: #{tpu_custom_call.1} parent=11 // pred_region
          _
        $region24: #{tpu_custom_call.1} parent=11 // pred_fallthru
          _
        // Predicated region
        $region25: #{tpu_custom_call.1} parent=11 // pred_check
          %p581 = pneg %p177
        $region26: #{tpu_custom_call.1} parent=11 // pred_check_branch
          %583 = sbr.rel (%p581) target = $region28
        $region27: #{tpu_custom_call.1} parent=11 // pred_region
          _
        $region28: #{tpu_custom_call.1} parent=11 // pred_fallthru
          _
        // Predicated region
        $region29: #{tpu_custom_call.1} parent=11 // pred_check
          %p584 = pneg %p510
        $region30: #{tpu_custom_call.1} parent=11 // pred_check_branch
          %586 = sbr.rel (%p584) target = $region32
        $region31: #{tpu_custom_call.1} parent=11 // pred_region
          _
        $region32: #{tpu_custom_call.1} parent=11 // pred_fallthru
          _
        // Predicated region
        $region33: #{tpu_custom_call.1} parent=11 // pred_check
          %p587 = pneg %p531
        $region34: #{tpu_custom_call.1} parent=11 // pred_check_branch
          %589 = sbr.rel (%p587) target = $region36
        $region35: #{tpu_custom_call.1} parent=11 // pred_region
          _
        $region36: #{tpu_custom_call.1} parent=11 // pred_fallthru
          _
      $region12: #{tpu_custom_call.1} parent=5 // pred_fallthru
        _
      %p590 = scmp.lt.s32.totalorder %s29, 4
      // Predicated region
      $region37: #{tpu_custom_call.1} parent=5 // pred_check
        %p591 = pneg %p590
      $region38: #{tpu_custom_call.1} parent=5 // pred_check_branch
        %593 = sbr.rel (%p591) target = $region40
      $region39: #{tpu_custom_call.1} parent=5 // pred_region
        // Predicated region
        $region41: #{tpu_custom_call.1} parent=39 // pred_check
          %p594 = pneg %p61
        $region42: #{tpu_custom_call.1} parent=39 // pred_check_branch
          %596 = sbr.rel (%p594) target = $region44
        $region43: #{tpu_custom_call.1} parent=39 // pred_region
          %p597 = scmp.lt.s32.totalorder %s36, 1
          %s598 = scalar_select %p597, %s36, 1
          %s599 = smul.addr %s598, 2
          %s600 = smul.addr %s599, 8
          %s601 = scalar_lea.vmem %s0, %s600
        $region44: #{tpu_custom_call.1} parent=39 // pred_fallthru
          _
        // Predicated region
        $region45: #{tpu_custom_call.1} parent=39 // pred_check
          %p602 = pneg %p87
        $region46: #{tpu_custom_call.1} parent=39 // pred_check_branch
          %604 = sbr.rel (%p602) target = $region48
        $region47: #{tpu_custom_call.1} parent=39 // pred_region
          %p605 = scmp.lt.s32.totalorder %s36, 1
          %s606 = scalar_select %p605, %s36, 1
          %s607 = smul.addr %s606, 2
          %s608 = smul.addr %s607, 8
          %s609 = scalar_lea.vmem %s1, %s608
        $region48: #{tpu_custom_call.1} parent=39 // pred_fallthru
          _
        // Predicated region
        $region49: #{tpu_custom_call.1} parent=39 // pred_check
          %p610 = pneg %p197
        $region50: #{tpu_custom_call.1} parent=39 // pred_check_branch
          %612 = sbr.rel (%p610) target = $region52
        $region51: #{tpu_custom_call.1} parent=39 // pred_region
          %p613 = scmp.lt.s32.totalorder %s37, 1
          %s614 = scalar_select %p613, %s37, 1
          %s615 = scalar_lea.vmem %s6, %s614
        $region52: #{tpu_custom_call.1} parent=39 // pred_fallthru
          _
        // Predicated region
        $region53: #{tpu_custom_call.1} parent=39 // pred_check
          %p616 = pneg %p223
        $region54: #{tpu_custom_call.1} parent=39 // pred_check_branch
          %618 = sbr.rel (%p616) target = $region56
        $region55: #{tpu_custom_call.1} parent=39 // pred_region
          %p619 = scmp.lt.s32.totalorder %s37, 1
          %s620 = scalar_select %p619, %s37, 1
          %s621 = scalar_lea.vmem %s7, %s620
        $region56: #{tpu_custom_call.1} parent=39 // pred_fallthru
          _
        // Predicated region
        $region57: #{tpu_custom_call.1} parent=39 // pred_check
          %p622 = pneg %p249
        $region58: #{tpu_custom_call.1} parent=39 // pred_check_branch
          %624 = sbr.rel (%p622) target = $region60
        $region59: #{tpu_custom_call.1} parent=39 // pred_region
          %p625 = scmp.lt.s32.totalorder %s37, 1
          %s626 = scalar_select %p625, %s37, 1
          %s627 = smul.addr %s626, 4
          %s628 = smul.addr %s627, 4
          %s629 = scalar_lea.vmem %s8, %s628
        $region60: #{tpu_custom_call.1} parent=39 // pred_fallthru
          _
        // Predicated region
        $region61: #{tpu_custom_call.1} parent=39 // pred_check
          %p630 = pneg %p275
        $region62: #{tpu_custom_call.1} parent=39 // pred_check_branch
          %632 = sbr.rel (%p630) target = $region64
        $region63: #{tpu_custom_call.1} parent=39 // pred_region
          %p633 = scmp.lt.s32.totalorder %s37, 1
          %s634 = scalar_select %p633, %s37, 1
          %s635 = scalar_lea.vmem %s9, %s634
        $region64: #{tpu_custom_call.1} parent=39 // pred_fallthru
          _
        // Predicated region
        $region65: #{tpu_custom_call.1} parent=39 // pred_check
          %p636 = pneg %p301
        $region66: #{tpu_custom_call.1} parent=39 // pred_check_branch
          %638 = sbr.rel (%p636) target = $region68
        $region67: #{tpu_custom_call.1} parent=39 // pred_region
          %p639 = scmp.lt.s32.totalorder %s37, 1
          %s640 = scalar_select %p639, %s37, 1
          %s641 = smul.addr %s640, 4
          %s642 = smul.addr %s641, 4
          %s643 = scalar_lea.vmem %s10, %s642
        $region68: #{tpu_custom_call.1} parent=39 // pred_fallthru
          _
        // Predicated region
        $region69: #{tpu_custom_call.1} parent=39 // pred_check
          %p644 = pneg %p327
        $region70: #{tpu_custom_call.1} parent=39 // pred_check_branch
          %646 = sbr.rel (%p644) target = $region72
        $region71: #{tpu_custom_call.1} parent=39 // pred_region
          %p647 = scmp.lt.s32.totalorder %s37, 1
          %s648 = scalar_select %p647, %s37, 1
          %s649 = scalar_lea.vmem %s11, %s648
        $region72: #{tpu_custom_call.1} parent=39 // pred_fallthru
          _
        // Predicated region
        $region73: #{tpu_custom_call.1} parent=39 // pred_check
          %p650 = pneg %p353
        $region74: #{tpu_custom_call.1} parent=39 // pred_check_branch
          %652 = sbr.rel (%p650) target = $region76
        $region75: #{tpu_custom_call.1} parent=39 // pred_region
          %p653 = scmp.lt.s32.totalorder %s37, 1
          %s654 = scalar_select %p653, %s37, 1
          %s655 = scalar_lea.vmem %s12, %s654
        $region76: #{tpu_custom_call.1} parent=39 // pred_fallthru
          _
        // Predicated region
        $region77: #{tpu_custom_call.1} parent=39 // pred_check
          %p656 = pneg %p379
        $region78: #{tpu_custom_call.1} parent=39 // pred_check_branch
          %658 = sbr.rel (%p656) target = $region80
        $region79: #{tpu_custom_call.1} parent=39 // pred_region
          %p659 = scmp.lt.s32.totalorder %s37, 1
          %s660 = scalar_select %p659, %s37, 1
          %s661 = scalar_lea.vmem %s13, %s660
        $region80: #{tpu_custom_call.1} parent=39 // pred_fallthru
          _
        // Predicated region
        $region81: #{tpu_custom_call.1} parent=39 // pred_check
          %p662 = pneg %p405
        $region82: #{tpu_custom_call.1} parent=39 // pred_check_branch
          %664 = sbr.rel (%p662) target = $region84
        $region83: #{tpu_custom_call.1} parent=39 // pred_region
          %p665 = scmp.lt.s32.totalorder %s37, 1
          %s666 = scalar_select %p665, %s37, 1
          %s667 = smul.addr %s666, 4
          %s668 = smul.addr %s667, 4
          %s669 = scalar_lea.vmem %s14, %s668
        $region84: #{tpu_custom_call.1} parent=39 // pred_fallthru
          _
        // Predicated region
        $region85: #{tpu_custom_call.1} parent=39 // pred_check
          %p670 = pneg %p431
        $region86: #{tpu_custom_call.1} parent=39 // pred_check_branch
          %672 = sbr.rel (%p670) target = $region88
        $region87: #{tpu_custom_call.1} parent=39 // pred_region
          %p673 = scmp.lt.s32.totalorder %s37, 1
          %s674 = scalar_select %p673, %s37, 1
          %s675 = scalar_lea.vmem %s15, %s674
        $region88: #{tpu_custom_call.1} parent=39 // pred_fallthru
          _
        // Predicated region
        $region89: #{tpu_custom_call.1} parent=39 // pred_check
          %p676 = pneg %p457
        $region90: #{tpu_custom_call.1} parent=39 // pred_check_branch
          %678 = sbr.rel (%p676) target = $region92
        $region91: #{tpu_custom_call.1} parent=39 // pred_region
          %p679 = scmp.lt.s32.totalorder %s37, 1
          %s680 = scalar_select %p679, %s37, 1
          %s681 = smul.addr %s680, 16
          %s682 = smul.addr %s681, 4
          %s683 = scalar_lea.vmem %s16, %s682
        $region92: #{tpu_custom_call.1} parent=39 // pred_fallthru
          _
        // Predicated region
        $region93: #{tpu_custom_call.1} parent=39 // pred_check
          %p684 = pneg %p483
        $region94: #{tpu_custom_call.1} parent=39 // pred_check_branch
          %686 = sbr.rel (%p684) target = $region96
        $region95: #{tpu_custom_call.1} parent=39 // pred_region
          %p687 = scmp.lt.s32.totalorder %s37, 1
          %s688 = scalar_select %p687, %s37, 1
          %s689 = scalar_lea.vmem %s17, %s688
        $region96: #{tpu_custom_call.1} parent=39 // pred_fallthru
          _
      $region40: #{tpu_custom_call.1} parent=5 // pred_fallthru
        _
      %p690 = scmp.le.s32.totalorder 1, %s29
      %p691 = scmp.lt.s32.totalorder %s29, 5
      %p692 = pnand %p690, %p691
      %p693 = pneg %p692
      // Predicated region
      $region97: #{tpu_custom_call.1} parent=5 // pred_check
        _
      $region98: #{tpu_custom_call.1} parent=5 // pred_check_branch
        %695 = sbr.rel (%p692) target = $region100
      $region99: #{tpu_custom_call.1} parent=5 // pred_region
        %s696 = ssub.s32 %s29, 1
        %p697 = scmp.lt.s32.totalorder %s38, 1
        %s698 = scalar_select %p697, %s38, 1
        %s699 = smul.addr %s698, 2
        %s700 = smul.addr %s699, 8
        %s701 = scalar_lea.vmem %s0, %s700
        %p702 = pneg %p67
        %p703 = pneg %p64
        %p704 = scmp.lt.s32.totalorder %s38, 1
        %s705 = scalar_select %p704, %s38, 1
        %s706 = smul.addr %s705, 2
        %s707 = smul.addr %s706, 8
        %s708 = scalar_lea.vmem %s1, %s707
        %p709 = pneg %p93
        %p710 = pneg %p90
        %p711 = pneg %p114
        %p712 = pneg %p111
        %p713 = pneg %p135
        %p714 = pneg %p132
        %p715 = pneg %p156
        %p716 = pneg %p153
        %p717 = pneg %p177
        %p718 = pneg %p174
        %p719 = scmp.lt.s32.totalorder %s39, 1
        %s720 = scalar_select %p719, %s39, 1
        %s721 = scalar_lea.vmem %s6, %s720
        %p722 = pneg %p203
        %p723 = pneg %p200
        %p724 = scmp.lt.s32.totalorder %s39, 1
        %s725 = scalar_select %p724, %s39, 1
        %s726 = scalar_lea.vmem %s7, %s725
        %p727 = pneg %p229
        %p728 = pneg %p226
        %p729 = scmp.lt.s32.totalorder %s39, 1
        %s730 = scalar_select %p729, %s39, 1
        %s731 = smul.addr %s730, 4
        %s732 = smul.addr %s731, 4
        %s733 = scalar_lea.vmem %s8, %s732
        %p734 = pneg %p255
        %p735 = pneg %p252
        %p736 = scmp.lt.s32.totalorder %s39, 1
        %s737 = scalar_select %p736, %s39, 1
        %s738 = scalar_lea.vmem %s9, %s737
        %p739 = pneg %p281
        %p740 = pneg %p278
        %p741 = scmp.lt.s32.totalorder %s39, 1
        %s742 = scalar_select %p741, %s39, 1
        %s743 = smul.addr %s742, 4
        %s744 = smul.addr %s743, 4
        %s745 = scalar_lea.vmem %s10, %s744
        %p746 = pneg %p307
        %p747 = pneg %p304
        %p748 = scmp.lt.s32.totalorder %s39, 1
        %s749 = scalar_select %p748, %s39, 1
        %s750 = scalar_lea.vmem %s11, %s749
        %p751 = pneg %p333
        %p752 = pneg %p330
        %p753 = scmp.lt.s32.totalorder %s39, 1
        %s754 = scalar_select %p753, %s39, 1
        %s755 = scalar_lea.vmem %s12, %s754
        %p756 = pneg %p359
        %p757 = pneg %p356
        %p758 = scmp.lt.s32.totalorder %s39, 1
        %s759 = scalar_select %p758, %s39, 1
        %s760 = scalar_lea.vmem %s13, %s759
        %p761 = pneg %p385
        %p762 = pneg %p382
        %p763 = scmp.lt.s32.totalorder %s39, 1
        %s764 = scalar_select %p763, %s39, 1
        %s765 = smul.addr %s764, 4
        %s766 = smul.addr %s765, 4
        %s767 = scalar_lea.vmem %s14, %s766
        %p768 = pneg %p411
        %p769 = pneg %p408
        %p770 = scmp.lt.s32.totalorder %s39, 1
        %s771 = scalar_select %p770, %s39, 1
        %s772 = scalar_lea.vmem %s15, %s771
        %p773 = pneg %p437
        %p774 = pneg %p434
        %p775 = scmp.lt.s32.totalorder %s39, 1
        %s776 = scalar_select %p775, %s39, 1
        %s777 = smul.addr %s776, 16
        %s778 = smul.addr %s777, 4
        %s779 = scalar_lea.vmem %s16, %s778
        %p780 = pneg %p463
        %p781 = pneg %p460
        %p782 = scmp.lt.s32.totalorder %s39, 1
        %s783 = scalar_select %p782, %s39, 1
        %s784 = scalar_lea.vmem %s17, %s783
        %p785 = pneg %p489
        %p786 = pneg %p486
        %p787 = pneg %p510
        %p788 = pneg %p507
        %p789 = pneg %p531
        %p790 = pneg %p528
        %p791 = pneg %p557
        %p792 = pneg %p554
        %s793 = sand.u32 %s544, 1
        %s794 = scalar_lea.sflag [#allocation5], %s793
        %s795 = sand.u32 %s544, 1
        %s796 = smul.addr %s795, 16
        %s797 = scalar_lea.vmem [#allocation4], %s796
        %p798 = scmp.lt.s32.totalorder %s38, 1
        %s799 = scalar_select %p798, %s38, 1
        %s800 = smul.addr %s799, 2
        %s801 = smul.addr %s800, 8
        %s802 = scalar_lea.vmem %s0, %s801
        %p803 = scmp.lt.s32.totalorder %s38, 1
        %s804 = scalar_select %p803, %s38, 1
        %s805 = smul.addr %s804, 2
        %s806 = smul.addr %s805, 8
        %s807 = scalar_lea.vmem %s1, %s806
        %p808 = scmp.lt.s32.totalorder %s39, 1
        %s809 = scalar_select %p808, %s39, 1
        %s810 = scalar_lea.vmem %s6, %s809
        %p811 = scmp.lt.s32.totalorder %s39, 1
        %s812 = scalar_select %p811, %s39, 1
        %s813 = scalar_lea.vmem %s7, %s812
        %p814 = scmp.lt.s32.totalorder %s39, 1
        %s815 = scalar_select %p814, %s39, 1
        %s816 = smul.addr %s815, 4
        %s817 = smul.addr %s816, 4
        %s818 = scalar_lea.vmem %s8, %s817
        %p819 = scmp.lt.s32.totalorder %s39, 1
        %s820 = scalar_select %p819, %s39, 1
        %s821 = scalar_lea.vmem %s9, %s820
        %p822 = scmp.lt.s32.totalorder %s39, 1
        %s823 = scalar_select %p822, %s39, 1
        %s824 = smul.addr %s823, 4
        %s825 = smul.addr %s824, 4
        %s826 = scalar_lea.vmem %s10, %s825
        %p827 = scmp.lt.s32.totalorder %s39, 1
        %s828 = scalar_select %p827, %s39, 1
        %s829 = scalar_lea.vmem %s11, %s828
        %p830 = scmp.lt.s32.totalorder %s39, 1
        %s831 = scalar_select %p830, %s39, 1
        %s832 = scalar_lea.vmem %s12, %s831
        %p833 = scmp.lt.s32.totalorder %s39, 1
        %s834 = scalar_select %p833, %s39, 1
        %s835 = scalar_lea.vmem %s13, %s834
        %p836 = scmp.lt.s32.totalorder %s39, 1
        %s837 = scalar_select %p836, %s39, 1
        %s838 = smul.addr %s837, 4
        %s839 = smul.addr %s838, 4
        %s840 = scalar_lea.vmem %s14, %s839
        %p841 = scmp.lt.s32.totalorder %s39, 1
        %s842 = scalar_select %p841, %s39, 1
        %s843 = scalar_lea.vmem %s15, %s842
        %p844 = scmp.lt.s32.totalorder %s39, 1
        %s845 = scalar_select %p844, %s39, 1
        %s846 = smul.addr %s845, 16
        %s847 = smul.addr %s846, 4
        %s848 = scalar_lea.vmem %s16, %s847
        %p849 = scmp.lt.s32.totalorder %s39, 1
        %s850 = scalar_select %p849, %s39, 1
        %s851 = scalar_lea.vmem %s17, %s850
        %p853 = scmp.eq.s32.totalorder %s39, 0
        // Predicated region
        $region101: #{tpu_custom_call.1} parent=99 // pred_check
          %p854 = pneg %p853
        $region102: #{tpu_custom_call.1} parent=99 // pred_check_branch
          %856 = sbr.rel (%p854) target = $region104
        $region103: #{tpu_custom_call.1} parent=99 // pred_region
          %v857 = vld [vmem:[%s807] sm:$0xff]
          %v858 = vld [vmem:[%s807 + $0x8] sm:$0xff]
          %v859 = vld [vmem:[%s802] sm:$0xff]
          %v860 = vld [vmem:[%s802 + $0x8] sm:$0xff]
          %v861 = vpack.c.bf16 %v860, %v859
          %v862 = vld [vmem:[%s3] sm:$0xf]
          %v863 = vld [vmem:[%s3 + $0x4] sm:$0xf]
          %v864 = vld [vmem:[%s3 + $0x8] sm:$0xf]
          %v865 = vld [vmem:[%s3 + $0xc] sm:$0xf]
          %v866 = vld [vmem:[%s3 + $0x10] sm:$0xf]
          %v867 = vld [vmem:[%s3 + $0x14] sm:$0xf]
          %v868 = vld [vmem:[%s4] sm:$0x1]
          %v870 = vlaneseq
          %v871 = vshrl.u32 %v870, 7
          %v872 = vsub.s32 0, %v871
          %v873 = vrot.slane %v868, %v872
          %v881 = vunpack.c.l.b16 %v862
          %v882 = vunpack.c.l.b16 %v863
          %v883 = vunpack.c.l.b16 %v864
          %v884 = vunpack.c.l.b16 %v865
          %v885 = vunpack.c.l.b16 %v866
          %v886 = vunpack.c.l.b16 %v867
          %v887 = vpack.c.b16 %v882, %v881
          %v888 = vpack.c.b16 %v884, %v883
          %v889 = vpack.c.b16 %v886, %v885
          %vm893 = vcmask 392192
          %v895 = vsel %vm893, %v861, 0
          %897 = vmatprep.subr.bf16.mxu0 0
          %898 = vmatpush1.bf16.msra.mxu0 0
          %899 = vmatprep.subr.bf16.mxu0 0
          %900 = vmatpush1.bf16.msra.mxu0 0
          %901 = vmatprep.subr.bf16.mxu0 0
          %902 = vmatpush1.bf16.msra.mxu0 0
          %903 = vmatprep.subr.bf16.mxu0 0
          %904 = vmatpush1.bf16.msra.mxu0 0
          %905 = vmatprep.subr.bf16.mxu0 0
          %906 = vmatpush1.bf16.msra.mxu0 0
          %907 = vmatprep.subr.bf16.mxu0 0
          %908 = vmatpush1.bf16.msra.mxu0 %v889
          %909 = vmatprep.subr.bf16.mxu0 0
          %910 = vmatpush1.bf16.msra.mxu0 %v888
          %911 = vmatprep.subr.bf16.mxu0 0
          %912 = vmatpush1.bf16.msra.mxu0 %v887
          %913 = vmatprep.subr.bf16.mxu0 0
          %914 = vmatpush2.bf16.msra.mxu0 0
          %915 = vmatprep.subr.bf16.mxu0 0
          %916 = vmatpush2.bf16.msra.mxu0 0
          %917 = vmatprep.subr.bf16.mxu0 0
          %918 = vmatpush2.bf16.msra.mxu0 0
          %919 = vmatprep.subr.bf16.mxu0 0
          %920 = vmatpush2.bf16.msra.mxu0 0
          %921 = vmatprep.subr.bf16.mxu0 0
          %922 = vmatpush2.bf16.msra.mxu0 0
          %923 = vmatprep.subr.bf16.mxu0 0
          %924 = vmatpush2.bf16.msra.mxu0 0
          %925 = vmatprep.subr.bf16.mxu0 0
          %926 = vmatpush2.bf16.msra.mxu0 0
          %927 = vmatprep.subr.bf16.mxu0 0
          %928 = vmatpush2.bf16.msra.mxu0 0
          %929 = vmatprep.mubr.bf16.mxu0 0
          %930 = vmatmul.mubr.bf16.gmra.mxu0 %v895
          %v931 = vpop.f32.mrf.mxu0
          %v932 = vadd.f32 %v873, %v931
          %v933 = vpop.f32.mrf.mxu0
          %v934 = vpop.f32.mrf.mxu0
          %v935 = vadd.f32 %v873, %v934
          %v936 = vpop.f32.mrf.mxu0
          %937 = vdwg.mxu0
          %v938 = vadd.f32 %v932, %v857
          %v939 = vadd.f32 %v935, %v858
          %vm940 = vcmask 261120
          %941 = vst.msk [vmem:[#allocation2] sm:$0xff] %vm940, %v938
          %942 = vst.msk [vmem:[#allocation2 + $0x8] sm:$0xff] %vm940, %v939
          %v943 = vld [vmem:[%s5] sm:$0x1]
          %v944 = vadd.f32 %v943, %v857
          %vm945 = vcmask 253952
          %946 = vst.msk [vmem:[#allocation2] sm:$0x1] %vm945, %v944
        $region104: #{tpu_custom_call.1} parent=99 // pred_fallthru
          _
        %v947 = vld [vmem:[#allocation2] sm:$0xff]
        %v948 = vld [vmem:[#allocation2 + $0x8] sm:$0xff]
        %v949 = vld [vmem:[%s2] sm:$0x1]
        %v950 = vld [vmem:[%s810] sm:$0x1]
        %v951 = vld [vmem:[%s813] sm:$0x1]
        %vm952 = vcmask 261120
        %v953 = vsel %vm952, %v947, 0.0
        %954 = vadd.xlane.f32.xlu0 %v953
        %v955 = vpop.xlane.xlu0 %954
        %v956 = vsel %vm952, %v948, 0.0
        %957 = vadd.xlane.f32.xlu0 %v956
        %v958 = vpop.xlane.xlu0 %957
        %v959 = vrcp.pop 32.0
        %v960 = vmul.f32 %v955, %v959
        %v961 = vmul.f32 %v958, %v959
        %v962 = vsub.f32 %v947, %v960
        %v963 = vsub.f32 %v948, %v961
        %v964 = vmul.f32 %v962, %v962
        %v965 = vmul.f32 %v963, %v963
        %v966 = vsel %vm952, %v964, 0.0
        %967 = vadd.xlane.f32.xlu0 %v966
        %v968 = vpop.xlane.xlu0 %967
        %v969 = vsel %vm952, %v965, 0.0
        %970 = vadd.xlane.f32.xlu0 %v969
        %v971 = vpop.xlane.xlu0 %970
        %v972 = vmul.f32 %v968, %v959
        %v973 = vmul.f32 %v971, %v959
        %v974 = vadd.f32 %v972, 1e-06
        %v975 = vadd.f32 %v973, 1e-06
        %v976 = vrsqrt.pop %v974
        %v977 = vrsqrt.pop %v975
        %v978 = vmul.f32 %v962, %v976
        %v979 = vmul.f32 %v963, %v977
        %v981 = vlaneseq
        %v982 = vshrl.u32 %v981, 7
        %v983 = vsub.s32 0, %v982
        %v984 = vrot.slane %v950, %v983
        %v986 = vmul.f32 %v978, %v984
        %v987 = vmul.f32 %v979, %v984
        %v989 = vlaneseq
        %v990 = vshrl.u32 %v989, 7
        %v991 = vsub.s32 0, %v990
        %v992 = vrot.slane %v951, %v991
        %v994 = vadd.f32 %v986, %v992
        %v995 = vadd.f32 %v987, %v992
        %v996 = vpack.c.bf16 %v995, %v994
        %v997 = vld [vmem:[%s818] sm:$0xf]
        %v998 = vld [vmem:[%s818 + $0x4] sm:$0xf]
        %v999 = vld [vmem:[%s818 + $0x8] sm:$0xf]
        %v1000 = vld [vmem:[%s818 + $0xc] sm:$0xf]
        %v1001 = vld [vmem:[%s821] sm:$0x1]
        %v1003 = vlaneseq
        %v1004 = vshrl.u32 %v1003, 7
        %v1005 = vsub.s32 0, %v1004
        %v1006 = vrot.slane %v1001, %v1005
        %v1012 = vunpack.c.l.b16 %v997
        %v1013 = vunpack.c.l.b16 %v998
        %v1014 = vunpack.c.l.b16 %v999
        %v1015 = vunpack.c.l.b16 %v1000
        %v1016 = vpack.c.b16 %v1013, %v1012
        %v1017 = vpack.c.b16 %v1015, %v1014
        %v1021 = vsel %vm952, %v996, 0
        %1023 = vmatprep.subr.bf16.mxu0 0
        %1024 = vmatpush1.bf16.msra.mxu0 0
        %1025 = vmatprep.subr.bf16.mxu0 0
        %1026 = vmatpush1.bf16.msra.mxu0 0
        %1027 = vmatprep.subr.bf16.mxu0 0
        %1028 = vmatpush1.bf16.msra.mxu0 0
        %1029 = vmatprep.subr.bf16.mxu0 0
        %1030 = vmatpush1.bf16.msra.mxu0 0
        %1031 = vmatprep.subr.bf16.mxu0 0
        %1032 = vmatpush1.bf16.msra.mxu0 0
        %1033 = vmatprep.subr.bf16.mxu0 0
        %1034 = vmatpush1.bf16.msra.mxu0 0
        %1035 = vmatprep.subr.bf16.mxu0 0
        %1036 = vmatpush1.bf16.msra.mxu0 %v1017
        %1037 = vmatprep.subr.bf16.mxu0 0
        %1038 = vmatpush1.bf16.msra.mxu0 %v1016
        %1039 = vmatprep.subr.bf16.mxu0 0
        %1040 = vmatpush2.bf16.msra.mxu0 0
        %1041 = vmatprep.subr.bf16.mxu0 0
        %1042 = vmatpush2.bf16.msra.mxu0 0
        %1043 = vmatprep.subr.bf16.mxu0 0
        %1044 = vmatpush2.bf16.msra.mxu0 0
        %1045 = vmatprep.subr.bf16.mxu0 0
        %1046 = vmatpush2.bf16.msra.mxu0 0
        %1047 = vmatprep.subr.bf16.mxu0 0
        %1048 = vmatpush2.bf16.msra.mxu0 0
        %1049 = vmatprep.subr.bf16.mxu0 0
        %1050 = vmatpush2.bf16.msra.mxu0 0
        %1051 = vmatprep.subr.bf16.mxu0 0
        %1052 = vmatpush2.bf16.msra.mxu0 0
        %1053 = vmatprep.subr.bf16.mxu0 0
        %1054 = vmatpush2.bf16.msra.mxu0 0
        %1055 = vmatprep.mubr.bf16.mxu0 0
        %1056 = vmatmul.mubr.bf16.gmra.mxu0 %v1021
        %v1057 = vpop.f32.mrf.mxu0
        %v1058 = vadd.f32 %v1006, %v1057
        %v1059 = vpop.f32.mrf.mxu0
        %v1060 = vpop.f32.mrf.mxu0
        %v1061 = vadd.f32 %v1006, %v1060
        %v1062 = vpop.f32.mrf.mxu0
        %1063 = vdwg.mxu0
        %v1064 = vmul.f32 %v1058, 0.35355338
        %v1065 = vmul.f32 %v1061, 0.35355338
        %v1066 = vpack.c.bf16 %v1065, %v1064
        %v1067 = vpack.c.bf16 %v1061, %v1058
        %v1069 = vlaneseq
        %v1070 = vshrl.u32 %v1069, 7
        %v1071 = vsub.s32 0, %v1070
        %v1072 = vrot.slane %v949, %v1071
        %1075 = vrot.lane.b32.xlu0 %v1067, 96
        %v1076 = vpop.permute.xlu0 %1075
        %vm1077 = vcmask 64512
        %v1079 = vsel %vm1077, %v1066, 0
        %v1082 = vsel %vm1077, %v1076, 0
        %1084 = vmatprep.subr.bf16.mxu0 0
        %1085 = vmatpush1.bf16.xpose.msra.mxu0 0
        %1086 = vmatprep.subr.bf16.mxu0 0
        %1087 = vmatpush1.bf16.xpose.msra.mxu0 0
        %1088 = vmatprep.subr.bf16.mxu0 0
        %1089 = vmatpush1.bf16.xpose.msra.mxu0 0
        %1090 = vmatprep.subr.bf16.mxu0 0
        %1091 = vmatpush1.bf16.xpose.msra.mxu0 0
        %1092 = vmatprep.subr.bf16.mxu0 0
        %1093 = vmatpush1.bf16.xpose.msra.mxu0 0
        %1094 = vmatprep.subr.bf16.mxu0 0
        %1095 = vmatpush1.bf16.xpose.msra.mxu0 0
        %1096 = vmatprep.subr.bf16.mxu0 0
        %1097 = vmatpush1.bf16.xpose.msra.mxu0 0
        %1098 = vmatprep.subr.bf16.mxu0 0
        %1099 = vmatpush1.bf16.xpose.msra.mxu0 %v1082
        %1100 = vmatprep.subr.bf16.mxu0 0
        %1101 = vmatpush2.bf16.xpose.msra.mxu0 0
        %1102 = vmatprep.subr.bf16.mxu0 0
        %1103 = vmatpush2.bf16.xpose.msra.mxu0 0
        %1104 = vmatprep.subr.bf16.mxu0 0
        %1105 = vmatpush2.bf16.xpose.msra.mxu0 0
        %1106 = vmatprep.subr.bf16.mxu0 0
        %1107 = vmatpush2.bf16.xpose.msra.mxu0 0
        %1108 = vmatprep.subr.bf16.mxu0 0
        %1109 = vmatpush2.bf16.xpose.msra.mxu0 0
        %1110 = vmatprep.subr.bf16.mxu0 0
        %1111 = vmatpush2.bf16.xpose.msra.mxu0 0
        %1112 = vmatprep.subr.bf16.mxu0 0
        %1113 = vmatpush2.bf16.xpose.msra.mxu0 0
        %1114 = vmatprep.subr.bf16.mxu0 0
        %1115 = vmatpush2.bf16.xpose.msra.mxu0 0
        %1116 = vmatprep.mubr.bf16.mxu0 0
        %1117 = vmatmul.mubr.bf16.gmra.mxu0 %v1079
        %v1118 = vpop.f32.mrf.mxu0
        %v1119 = vadd.f32 %v1072, %v1118
        %v1120 = vpop.f32.mrf.mxu0
        %v1121 = vpop.f32.mrf.mxu0
        %v1122 = vadd.f32 %v1072, %v1121
        %v1123 = vpop.f32.mrf.mxu0
        %1124 = vdwg.mxu0
        %vm1125 = vcmask 130048
        %v1126 = vsel %vm1125, %v1119, -inf
        %1127 = vmax.xlane.f32.xlu0 %v1126
        %v1128 = vpop.xlane.xlu0 %1127
        %v1129 = vsel %vm1125, %v1122, -inf
        %1130 = vmax.xlane.f32.xlu0 %v1129
        %v1131 = vpop.xlane.xlu0 %1130
        %v1132 = vsub.f32 %v1119, %v1128
        %v1133 = vsub.f32 %v1122, %v1131
        %v1134 = vmul.f32 %v1132, 1.442695
        %v1135 = vpow.pop %v1134
        %v1136 = vmul.f32 %v1133, 1.442695
        %v1137 = vpow.pop %v1136
        %v1138 = vsel %vm1125, %v1135, 0.0
        %1139 = vadd.xlane.f32.xlu0 %v1138
        %v1140 = vpop.xlane.xlu0 %1139
        %v1141 = vsel %vm1125, %v1137, 0.0
        %1142 = vadd.xlane.f32.xlu0 %v1141
        %v1143 = vpop.xlane.xlu0 %1142
        %v1144 = vrcp.pop %v1140
        %v1145 = vrcp.pop %v1143
        %v1146 = vmul.f32 %v1135, %v1144
        %v1147 = vmul.f32 %v1137, %v1145
        %v1148 = vpack.c.bf16 %v1147, %v1146
        %1149 = vrot.lane.b32.xlu0 %v1067, 64
        %v1150 = vpop.permute.xlu0 %1149
        %v1153 = vsel %vm1125, %v1148, 0
        %1155 = vmatprep.subr.bf16.mxu0 0
        %1156 = vmatpush1.bf16.msra.mxu0 0
        %1157 = vmatprep.subr.bf16.mxu0 0
        %1158 = vmatpush1.bf16.msra.mxu0 0
        %1159 = vmatprep.subr.bf16.mxu0 0
        %1160 = vmatpush1.bf16.msra.mxu0 0
        %1161 = vmatprep.subr.bf16.mxu0 0
        %1162 = vmatpush1.bf16.msra.mxu0 0
        %1163 = vmatprep.subr.bf16.mxu0 0
        %1164 = vmatpush1.bf16.msra.mxu0 0
        %1165 = vmatprep.subr.bf16.mxu0 0
        %1166 = vmatpush1.bf16.msra.mxu0 0
        %1167 = vmatprep.subr.bf16.mxu0 0
        %1168 = vmatpush1.bf16.msra.mxu0 0
        %1169 = vmatprep.subr.bf16.mxu0 0
        %1170 = vmatpush1.bf16.msra.mxu0 %v1150
        %1171 = vmatprep.subr.bf16.mxu0 0
        %1172 = vmatpush2.bf16.msra.mxu0 0
        %1173 = vmatprep.subr.bf16.mxu0 0
        %1174 = vmatpush2.bf16.msra.mxu0 0
        %1175 = vmatprep.subr.bf16.mxu0 0
        %1176 = vmatpush2.bf16.msra.mxu0 0
        %1177 = vmatprep.subr.bf16.mxu0 0
        %1178 = vmatpush2.bf16.msra.mxu0 0
        %1179 = vmatprep.subr.bf16.mxu0 0
        %1180 = vmatpush2.bf16.msra.mxu0 0
        %1181 = vmatprep.subr.bf16.mxu0 0
        %1182 = vmatpush2.bf16.msra.mxu0 0
        %1183 = vmatprep.subr.bf16.mxu0 0
        %1184 = vmatpush2.bf16.msra.mxu0 0
        %1185 = vmatprep.subr.bf16.mxu0 0
        %1186 = vmatpush2.bf16.msra.mxu0 0
        %1187 = vmatprep.mubr.bf16.mxu0 0
        %1188 = vmatmul.mubr.bf16.gmra.mxu0 %v1153
        %v1189 = vpop.f32.mrf.mxu0
        %v1190 = vadd.f32 0.0, %v1189
        %v1191 = vpop.f32.mrf.mxu0
        %v1192 = vpop.f32.mrf.mxu0
        %v1193 = vadd.f32 0.0, %v1192
        %v1194 = vpop.f32.mrf.mxu0
        %1195 = vdwg.mxu0
        %1197 = vrot.lane.b32.xlu0 %v1066, 120
        %v1198 = vpop.permute.xlu0 %1197
        %1199 = vrot.lane.b32.xlu0 %v1067, 88
        %v1200 = vpop.permute.xlu0 %1199
        %v1202 = vsel %vm1077, %v1198, 0
        %v1205 = vsel %vm1077, %v1200, 0
        %1207 = vmatprep.subr.bf16.mxu0 0
        %1208 = vmatpush1.bf16.xpose.msra.mxu0 0
        %1209 = vmatprep.subr.bf16.mxu0 0
        %1210 = vmatpush1.bf16.xpose.msra.mxu0 0
        %1211 = vmatprep.subr.bf16.mxu0 0
        %1212 = vmatpush1.bf16.xpose.msra.mxu0 0
        %1213 = vmatprep.subr.bf16.mxu0 0
        %1214 = vmatpush1.bf16.xpose.msra.mxu0 0
        %1215 = vmatprep.subr.bf16.mxu0 0
        %1216 = vmatpush1.bf16.xpose.msra.mxu0 0
        %1217 = vmatprep.subr.bf16.mxu0 0
        %1218 = vmatpush1.bf16.xpose.msra.mxu0 0
        %1219 = vmatprep.subr.bf16.mxu0 0
        %1220 = vmatpush1.bf16.xpose.msra.mxu0 0
        %1221 = vmatprep.subr.bf16.mxu0 0
        %1222 = vmatpush1.bf16.xpose.msra.mxu0 %v1205
        %1223 = vmatprep.subr.bf16.mxu0 0
        %1224 = vmatpush2.bf16.xpose.msra.mxu0 0
        %1225 = vmatprep.subr.bf16.mxu0 0
        %1226 = vmatpush2.bf16.xpose.msra.mxu0 0
        %1227 = vmatprep.subr.bf16.mxu0 0
        %1228 = vmatpush2.bf16.xpose.msra.mxu0 0
        %1229 = vmatprep.subr.bf16.mxu0 0
        %1230 = vmatpush2.bf16.xpose.msra.mxu0 0
        %1231 = vmatprep.subr.bf16.mxu0 0
        %1232 = vmatpush2.bf16.xpose.msra.mxu0 0
        %1233 = vmatprep.subr.bf16.mxu0 0
        %1234 = vmatpush2.bf16.xpose.msra.mxu0 0
        %1235 = vmatprep.subr.bf16.mxu0 0
        %1236 = vmatpush2.bf16.xpose.msra.mxu0 0
        %1237 = vmatprep.subr.bf16.mxu0 0
        %1238 = vmatpush2.bf16.xpose.msra.mxu0 0
        %1239 = vmatprep.mubr.bf16.mxu0 0
        %1240 = vmatmul.mubr.bf16.gmra.mxu0 %v1202
        %v1241 = vpop.f32.mrf.mxu0
        %v1242 = vadd.f32 %v1072, %v1241
        %v1243 = vpop.f32.mrf.mxu0
        %v1244 = vpop.f32.mrf.mxu0
        %v1245 = vadd.f32 %v1072, %v1244
        %v1246 = vpop.f32.mrf.mxu0
        %1247 = vdwg.mxu0
        %v1248 = vsel %vm1125, %v1242, -inf
        %1249 = vmax.xlane.f32.xlu0 %v1248
        %v1250 = vpop.xlane.xlu0 %1249
        %v1251 = vsel %vm1125, %v1245, -inf
        %1252 = vmax.xlane.f32.xlu0 %v1251
        %v1253 = vpop.xlane.xlu0 %1252
        %v1254 = vsub.f32 %v1242, %v1250
        %v1255 = vsub.f32 %v1245, %v1253
        %v1256 = vmul.f32 %v1254, 1.442695
        %v1257 = vpow.pop %v1256
        %v1258 = vmul.f32 %v1255, 1.442695
        %v1259 = vpow.pop %v1258
        %v1260 = vsel %vm1125, %v1257, 0.0
        %1261 = vadd.xlane.f32.xlu0 %v1260
        %v1262 = vpop.xlane.xlu0 %1261
        %v1263 = vsel %vm1125, %v1259, 0.0
        %1264 = vadd.xlane.f32.xlu0 %v1263
        %v1265 = vpop.xlane.xlu0 %1264
        %v1266 = vrcp.pop %v1262
        %v1267 = vrcp.pop %v1265
        %v1268 = vmul.f32 %v1257, %v1266
        %v1269 = vmul.f32 %v1259, %v1267
        %v1270 = vpack.c.bf16 %v1269, %v1268
        %1271 = vrot.lane.b32.xlu0 %v1067, 56
        %v1272 = vpop.permute.xlu0 %1271
        %v1275 = vsel %vm1125, %v1270, 0
        %1277 = vmatprep.subr.bf16.mxu0 0
        %1278 = vmatpush1.bf16.msra.mxu0 0
        %1279 = vmatprep.subr.bf16.mxu0 0
        %1280 = vmatpush1.bf16.msra.mxu0 0
        %1281 = vmatprep.subr.bf16.mxu0 0
        %1282 = vmatpush1.bf16.msra.mxu0 0
        %1283 = vmatprep.subr.bf16.mxu0 0
        %1284 = vmatpush1.bf16.msra.mxu0 0
        %1285 = vmatprep.subr.bf16.mxu0 0
        %1286 = vmatpush1.bf16.msra.mxu0 0
        %1287 = vmatprep.subr.bf16.mxu0 0
        %1288 = vmatpush1.bf16.msra.mxu0 0
        %1289 = vmatprep.subr.bf16.mxu0 0
        %1290 = vmatpush1.bf16.msra.mxu0 0
        %1291 = vmatprep.subr.bf16.mxu0 0
        %1292 = vmatpush1.bf16.msra.mxu0 %v1272
        %1293 = vmatprep.subr.bf16.mxu0 0
        %1294 = vmatpush2.bf16.msra.mxu0 0
        %1295 = vmatprep.subr.bf16.mxu0 0
        %1296 = vmatpush2.bf16.msra.mxu0 0
        %1297 = vmatprep.subr.bf16.mxu0 0
        %1298 = vmatpush2.bf16.msra.mxu0 0
        %1299 = vmatprep.subr.bf16.mxu0 0
        %1300 = vmatpush2.bf16.msra.mxu0 0
        %1301 = vmatprep.subr.bf16.mxu0 0
        %1302 = vmatpush2.bf16.msra.mxu0 0
        %1303 = vmatprep.subr.bf16.mxu0 0
        %1304 = vmatpush2.bf16.msra.mxu0 0
        %1305 = vmatprep.subr.bf16.mxu0 0
        %1306 = vmatpush2.bf16.msra.mxu0 0
        %1307 = vmatprep.subr.bf16.mxu0 0
        %1308 = vmatpush2.bf16.msra.mxu0 0
        %1309 = vmatprep.mubr.bf16.mxu0 0
        %1310 = vmatmul.mubr.bf16.gmra.mxu0 %v1275
        %v1311 = vpop.f32.mrf.mxu0
        %v1312 = vadd.f32 0.0, %v1311
        %v1313 = vpop.f32.mrf.mxu0
        %v1314 = vpop.f32.mrf.mxu0
        %v1315 = vadd.f32 0.0, %v1314
        %v1316 = vpop.f32.mrf.mxu0
        %1317 = vdwg.mxu0
        %1318 = vrot.lane.b32.xlu0 %v1066, 112
        %v1319 = vpop.permute.xlu0 %1318
        %1320 = vrot.lane.b32.xlu0 %v1067, 80
        %v1321 = vpop.permute.xlu0 %1320
        %v1323 = vsel %vm1077, %v1319, 0
        %v1326 = vsel %vm1077, %v1321, 0
        %1328 = vmatprep.subr.bf16.mxu0 0
        %1329 = vmatpush1.bf16.xpose.msra.mxu0 0
        %1330 = vmatprep.subr.bf16.mxu0 0
        %1331 = vmatpush1.bf16.xpose.msra.mxu0 0
        %1332 = vmatprep.subr.bf16.mxu0 0
        %1333 = vmatpush1.bf16.xpose.msra.mxu0 0
        %1334 = vmatprep.subr.bf16.mxu0 0
        %1335 = vmatpush1.bf16.xpose.msra.mxu0 0
        %1336 = vmatprep.subr.bf16.mxu0 0
        %1337 = vmatpush1.bf16.xpose.msra.mxu0 0
        %1338 = vmatprep.subr.bf16.mxu0 0
        %1339 = vmatpush1.bf16.xpose.msra.mxu0 0
        %1340 = vmatprep.subr.bf16.mxu0 0
        %1341 = vmatpush1.bf16.xpose.msra.mxu0 0
        %1342 = vmatprep.subr.bf16.mxu0 0
        %1343 = vmatpush1.bf16.xpose.msra.mxu0 %v1326
        %1344 = vmatprep.subr.bf16.mxu0 0
        %1345 = vmatpush2.bf16.xpose.msra.mxu0 0
        %1346 = vmatprep.subr.bf16.mxu0 0
        %1347 = vmatpush2.bf16.xpose.msra.mxu0 0
        %1348 = vmatprep.subr.bf16.mxu0 0
        %1349 = vmatpush2.bf16.xpose.msra.mxu0 0
        %1350 = vmatprep.subr.bf16.mxu0 0
        %1351 = vmatpush2.bf16.xpose.msra.mxu0 0
        %1352 = vmatprep.subr.bf16.mxu0 0
        %1353 = vmatpush2.bf16.xpose.msra.mxu0 0
        %1354 = vmatprep.subr.bf16.mxu0 0
        %1355 = vmatpush2.bf16.xpose.msra.mxu0 0
        %1356 = vmatprep.subr.bf16.mxu0 0
        %1357 = vmatpush2.bf16.xpose.msra.mxu0 0
        %1358 = vmatprep.subr.bf16.mxu0 0
        %1359 = vmatpush2.bf16.xpose.msra.mxu0 0
        %1360 = vmatprep.mubr.bf16.mxu0 0
        %1361 = vmatmul.mubr.bf16.gmra.mxu0 %v1323
        %v1362 = vpop.f32.mrf.mxu0
        %v1363 = vadd.f32 %v1072, %v1362
        %v1364 = vpop.f32.mrf.mxu0
        %v1365 = vpop.f32.mrf.mxu0
        %v1366 = vadd.f32 %v1072, %v1365
        %v1367 = vpop.f32.mrf.mxu0
        %1368 = vdwg.mxu0
        %v1369 = vsel %vm1125, %v1363, -inf
        %1370 = vmax.xlane.f32.xlu0 %v1369
        %v1371 = vpop.xlane.xlu0 %1370
        %v1372 = vsel %vm1125, %v1366, -inf
        %1373 = vmax.xlane.f32.xlu0 %v1372
        %v1374 = vpop.xlane.xlu0 %1373
        %v1375 = vsub.f32 %v1363, %v1371
        %v1376 = vsub.f32 %v1366, %v1374
        %v1377 = vmul.f32 %v1375, 1.442695
        %v1378 = vpow.pop %v1377
        %v1379 = vmul.f32 %v1376, 1.442695
        %v1380 = vpow.pop %v1379
        %v1381 = vsel %vm1125, %v1378, 0.0
        %1382 = vadd.xlane.f32.xlu0 %v1381
        %v1383 = vpop.xlane.xlu0 %1382
        %v1384 = vsel %vm1125, %v1380, 0.0
        %1385 = vadd.xlane.f32.xlu0 %v1384
        %v1386 = vpop.xlane.xlu0 %1385
        %v1387 = vrcp.pop %v1383
        %v1388 = vrcp.pop %v1386
        %v1389 = vmul.f32 %v1378, %v1387
        %v1390 = vmul.f32 %v1380, %v1388
        %v1391 = vpack.c.bf16 %v1390, %v1389
        %1392 = vrot.lane.b32.xlu0 %v1067, 48
        %v1393 = vpop.permute.xlu0 %1392
        %v1396 = vsel %vm1125, %v1391, 0
        %1398 = vmatprep.subr.bf16.mxu0 0
        %1399 = vmatpush1.bf16.msra.mxu0 0
        %1400 = vmatprep.subr.bf16.mxu0 0
        %1401 = vmatpush1.bf16.msra.mxu0 0
        %1402 = vmatprep.subr.bf16.mxu0 0
        %1403 = vmatpush1.bf16.msra.mxu0 0
        %1404 = vmatprep.subr.bf16.mxu0 0
        %1405 = vmatpush1.bf16.msra.mxu0 0
        %1406 = vmatprep.subr.bf16.mxu0 0
        %1407 = vmatpush1.bf16.msra.mxu0 0
        %1408 = vmatprep.subr.bf16.mxu0 0
        %1409 = vmatpush1.bf16.msra.mxu0 0
        %1410 = vmatprep.subr.bf16.mxu0 0
        %1411 = vmatpush1.bf16.msra.mxu0 0
        %1412 = vmatprep.subr.bf16.mxu0 0
        %1413 = vmatpush1.bf16.msra.mxu0 %v1393
        %1414 = vmatprep.subr.bf16.mxu0 0
        %1415 = vmatpush2.bf16.msra.mxu0 0
        %1416 = vmatprep.subr.bf16.mxu0 0
        %1417 = vmatpush2.bf16.msra.mxu0 0
        %1418 = vmatprep.subr.bf16.mxu0 0
        %1419 = vmatpush2.bf16.msra.mxu0 0
        %1420 = vmatprep.subr.bf16.mxu0 0
        %1421 = vmatpush2.bf16.msra.mxu0 0
        %1422 = vmatprep.subr.bf16.mxu0 0
        %1423 = vmatpush2.bf16.msra.mxu0 0
        %1424 = vmatprep.subr.bf16.mxu0 0
        %1425 = vmatpush2.bf16.msra.mxu0 0
        %1426 = vmatprep.subr.bf16.mxu0 0
        %1427 = vmatpush2.bf16.msra.mxu0 0
        %1428 = vmatprep.subr.bf16.mxu0 0
        %1429 = vmatpush2.bf16.msra.mxu0 0
        %1430 = vmatprep.mubr.bf16.mxu0 0
        %1431 = vmatmul.mubr.bf16.gmra.mxu0 %v1396
        %v1432 = vpop.f32.mrf.mxu0
        %v1433 = vadd.f32 0.0, %v1432
        %v1434 = vpop.f32.mrf.mxu0
        %v1435 = vpop.f32.mrf.mxu0
        %v1436 = vadd.f32 0.0, %v1435
        %v1437 = vpop.f32.mrf.mxu0
        %1438 = vdwg.mxu0
        %1439 = vrot.lane.b32.xlu0 %v1066, 104
        %v1440 = vpop.permute.xlu0 %1439
        %1441 = vrot.lane.b32.xlu0 %v1067, 72
        %v1442 = vpop.permute.xlu0 %1441
        %v1444 = vsel %vm1077, %v1440, 0
        %v1447 = vsel %vm1077, %v1442, 0
        %1449 = vmatprep.subr.bf16.mxu0 0
        %1450 = vmatpush1.bf16.xpose.msra.mxu0 0
        %1451 = vmatprep.subr.bf16.mxu0 0
        %1452 = vmatpush1.bf16.xpose.msra.mxu0 0
        %1453 = vmatprep.subr.bf16.mxu0 0
        %1454 = vmatpush1.bf16.xpose.msra.mxu0 0
        %1455 = vmatprep.subr.bf16.mxu0 0
        %1456 = vmatpush1.bf16.xpose.msra.mxu0 0
        %1457 = vmatprep.subr.bf16.mxu0 0
        %1458 = vmatpush1.bf16.xpose.msra.mxu0 0
        %1459 = vmatprep.subr.bf16.mxu0 0
        %1460 = vmatpush1.bf16.xpose.msra.mxu0 0
        %1461 = vmatprep.subr.bf16.mxu0 0
        %1462 = vmatpush1.bf16.xpose.msra.mxu0 0
        %1463 = vmatprep.subr.bf16.mxu0 0
        %1464 = vmatpush1.bf16.xpose.msra.mxu0 %v1447
        %1465 = vmatprep.subr.bf16.mxu0 0
        %1466 = vmatpush2.bf16.xpose.msra.mxu0 0
        %1467 = vmatprep.subr.bf16.mxu0 0
        %1468 = vmatpush2.bf16.xpose.msra.mxu0 0
        %1469 = vmatprep.subr.bf16.mxu0 0
        %1470 = vmatpush2.bf16.xpose.msra.mxu0 0
        %1471 = vmatprep.subr.bf16.mxu0 0
        %1472 = vmatpush2.bf16.xpose.msra.mxu0 0
        %1473 = vmatprep.subr.bf16.mxu0 0
        %1474 = vmatpush2.bf16.xpose.msra.mxu0 0
        %1475 = vmatprep.subr.bf16.mxu0 0
        %1476 = vmatpush2.bf16.xpose.msra.mxu0 0
        %1477 = vmatprep.subr.bf16.mxu0 0
        %1478 = vmatpush2.bf16.xpose.msra.mxu0 0
        %1479 = vmatprep.subr.bf16.mxu0 0
        %1480 = vmatpush2.bf16.xpose.msra.mxu0 0
        %1481 = vmatprep.mubr.bf16.mxu0 0
        %1482 = vmatmul.mubr.bf16.gmra.mxu0 %v1444
        %v1483 = vpop.f32.mrf.mxu0
        %v1484 = vadd.f32 %v1072, %v1483
        %v1485 = vpop.f32.mrf.mxu0
        %v1486 = vpop.f32.mrf.mxu0
        %v1487 = vadd.f32 %v1072, %v1486
        %v1488 = vpop.f32.mrf.mxu0
        %1489 = vdwg.mxu0
        %v1490 = vsel %vm1125, %v1484, -inf
        %1491 = vmax.xlane.f32.xlu0 %v1490
        %v1492 = vpop.xlane.xlu0 %1491
        %v1493 = vsel %vm1125, %v1487, -inf
        %1494 = vmax.xlane.f32.xlu0 %v1493
        %v1495 = vpop.xlane.xlu0 %1494
        %v1496 = vsub.f32 %v1484, %v1492
        %v1497 = vsub.f32 %v1487, %v1495
        %v1498 = vmul.f32 %v1496, 1.442695
        %v1499 = vpow.pop %v1498
        %v1500 = vmul.f32 %v1497, 1.442695
        %v1501 = vpow.pop %v1500
        %v1502 = vsel %vm1125, %v1499, 0.0
        %1503 = vadd.xlane.f32.xlu0 %v1502
        %v1504 = vpop.xlane.xlu0 %1503
        %v1505 = vsel %vm1125, %v1501, 0.0
        %1506 = vadd.xlane.f32.xlu0 %v1505
        %v1507 = vpop.xlane.xlu0 %1506
        %v1508 = vrcp.pop %v1504
        %v1509 = vrcp.pop %v1507
        %v1510 = vmul.f32 %v1499, %v1508
        %v1511 = vmul.f32 %v1501, %v1509
        %v1512 = vpack.c.bf16 %v1511, %v1510
        %1513 = vrot.lane.b32.xlu0 %v1067, 40
        %v1514 = vpop.permute.xlu0 %1513
        %v1517 = vsel %vm1125, %v1512, 0
        %1519 = vmatprep.subr.bf16.mxu0 0
        %1520 = vmatpush1.bf16.msra.mxu0 0
        %1521 = vmatprep.subr.bf16.mxu0 0
        %1522 = vmatpush1.bf16.msra.mxu0 0
        %1523 = vmatprep.subr.bf16.mxu0 0
        %1524 = vmatpush1.bf16.msra.mxu0 0
        %1525 = vmatprep.subr.bf16.mxu0 0
        %1526 = vmatpush1.bf16.msra.mxu0 0
        %1527 = vmatprep.subr.bf16.mxu0 0
        %1528 = vmatpush1.bf16.msra.mxu0 0
        %1529 = vmatprep.subr.bf16.mxu0 0
        %1530 = vmatpush1.bf16.msra.mxu0 0
        %1531 = vmatprep.subr.bf16.mxu0 0
        %1532 = vmatpush1.bf16.msra.mxu0 0
        %1533 = vmatprep.subr.bf16.mxu0 0
        %1534 = vmatpush1.bf16.msra.mxu0 %v1514
        %1535 = vmatprep.subr.bf16.mxu0 0
        %1536 = vmatpush2.bf16.msra.mxu0 0
        %1537 = vmatprep.subr.bf16.mxu0 0
        %1538 = vmatpush2.bf16.msra.mxu0 0
        %1539 = vmatprep.subr.bf16.mxu0 0
        %1540 = vmatpush2.bf16.msra.mxu0 0
        %1541 = vmatprep.subr.bf16.mxu0 0
        %1542 = vmatpush2.bf16.msra.mxu0 0
        %1543 = vmatprep.subr.bf16.mxu0 0
        %1544 = vmatpush2.bf16.msra.mxu0 0
        %1545 = vmatprep.subr.bf16.mxu0 0
        %1546 = vmatpush2.bf16.msra.mxu0 0
        %1547 = vmatprep.subr.bf16.mxu0 0
        %1548 = vmatpush2.bf16.msra.mxu0 0
        %1549 = vmatprep.subr.bf16.mxu0 0
        %1550 = vmatpush2.bf16.msra.mxu0 0
        %1551 = vmatprep.mubr.bf16.mxu0 0
        %1552 = vmatmul.mubr.bf16.gmra.mxu0 %v1517
        %v1553 = vpop.f32.mrf.mxu0
        %v1554 = vadd.f32 0.0, %v1553
        %v1555 = vpop.f32.mrf.mxu0
        %v1556 = vpop.f32.mrf.mxu0
        %v1557 = vadd.f32 0.0, %v1556
        %v1558 = vpop.f32.mrf.mxu0
        %1559 = vdwg.mxu0
        %1562 = vrot.lane.b32.xlu0 %v1312, 8
        %v1563 = vpop.permute.xlu0 %1562
        %1564 = vrot.lane.b32.xlu0 %v1315, 8
        %v1565 = vpop.permute.xlu0 %1564
        %1570 = vrot.lane.b32.xlu0 %v1433, 16
        %v1571 = vpop.permute.xlu0 %1570
        %1572 = vrot.lane.b32.xlu0 %v1436, 16
        %v1573 = vpop.permute.xlu0 %1572
        %1578 = vrot.lane.b32.xlu0 %v1554, 24
        %v1579 = vpop.permute.xlu0 %1578
        %1580 = vrot.lane.b32.xlu0 %v1557, 24
        %v1581 = vpop.permute.xlu0 %1580
        %v1584 = vsel %vm1077, %v1190, %v1563
        %v1585 = vsel %vm1077, %v1193, %v1565
        %v1586 = vsel %vm1125, %v1584, %v1571
        %v1587 = vsel %vm1125, %v1585, %v1573
        %vm1588 = vcmask 195584
        %v1589 = vsel %vm1588, %v1586, %v1579
        %v1590 = vsel %vm1588, %v1587, %v1581
        %v1591 = vpack.c.bf16 %v1590, %v1589
        %v1593 = vunpack.c.l.b16 %v1591
        %v1594 = vunpack.c.h.b16 %v1591
        %v1595 = vpack.c.b16 %v1593, %v1593
        %v1596 = vpack.c.b16 %v1594, %v1594
        %vm1599 = vcmask 257024
        %1600 = vst.msk [vmem:[#allocation3] sm:$0xf] %vm1599, %v1595
        %1601 = vst.msk [vmem:[#allocation3 + $0x4] sm:$0xf] %vm1599, %v1596
        %v1602 = vld [vmem:[#allocation3] sm:$0xf]
        %v1603 = vld [vmem:[#allocation3 + $0x4] sm:$0xf]
        %v1604 = vld [vmem:[%s826] sm:$0xf]
        %v1605 = vld [vmem:[%s826 + $0x4] sm:$0xf]
        %v1606 = vld [vmem:[%s826 + $0x8] sm:$0xf]
        %v1607 = vld [vmem:[%s826 + $0xc] sm:$0xf]
        %v1608 = vld [vmem:[%s829] sm:$0x1]
        %v1610 = vlaneseq
        %v1611 = vshrl.u32 %v1610, 7
        %v1612 = vsub.s32 0, %v1611
        %v1613 = vrot.slane %v1608, %v1612
        %v1617 = vunpack.c.l.b16 %v1602
        %v1618 = vunpack.c.l.b16 %v1603
        %v1619 = vpack.c.b16 %v1618, %v1617
        %v1624 = vunpack.c.l.b16 %v1604
        %v1625 = vunpack.c.l.b16 %v1605
        %v1626 = vunpack.c.l.b16 %v1606
        %v1627 = vunpack.c.l.b16 %v1607
        %v1628 = vpack.c.b16 %v1625, %v1624
        %v1629 = vpack.c.b16 %v1627, %v1626
        %v1633 = vsel %vm952, %v1619, 0
        %1635 = vmatprep.subr.bf16.mxu0 0
        %1636 = vmatpush1.bf16.msra.mxu0 0
        %1637 = vmatprep.subr.bf16.mxu0 0
        %1638 = vmatpush1.bf16.msra.mxu0 0
        %1639 = vmatprep.subr.bf16.mxu0 0
        %1640 = vmatpush1.bf16.msra.mxu0 0
        %1641 = vmatprep.subr.bf16.mxu0 0
        %1642 = vmatpush1.bf16.msra.mxu0 0
        %1643 = vmatprep.subr.bf16.mxu0 0
        %1644 = vmatpush1.bf16.msra.mxu0 0
        %1645 = vmatprep.subr.bf16.mxu0 0
        %1646 = vmatpush1.bf16.msra.mxu0 0
        %1647 = vmatprep.subr.bf16.mxu0 0
        %1648 = vmatpush1.bf16.msra.mxu0 %v1629
        %1649 = vmatprep.subr.bf16.mxu0 0
        %1650 = vmatpush1.bf16.msra.mxu0 %v1628
        %1651 = vmatprep.subr.bf16.mxu0 0
        %1652 = vmatpush2.bf16.msra.mxu0 0
        %1653 = vmatprep.subr.bf16.mxu0 0
        %1654 = vmatpush2.bf16.msra.mxu0 0
        %1655 = vmatprep.subr.bf16.mxu0 0
        %1656 = vmatpush2.bf16.msra.mxu0 0
        %1657 = vmatprep.subr.bf16.mxu0 0
        %1658 = vmatpush2.bf16.msra.mxu0 0
        %1659 = vmatprep.subr.bf16.mxu0 0
        %1660 = vmatpush2.bf16.msra.mxu0 0
        %1661 = vmatprep.subr.bf16.mxu0 0
        %1662 = vmatpush2.bf16.msra.mxu0 0
        %1663 = vmatprep.subr.bf16.mxu0 0
        %1664 = vmatpush2.bf16.msra.mxu0 0
        %1665 = vmatprep.subr.bf16.mxu0 0
        %1666 = vmatpush2.bf16.msra.mxu0 0
        %1667 = vmatprep.mubr.bf16.mxu0 0
        %1668 = vmatmul.mubr.bf16.gmra.mxu0 %v1633
        %v1669 = vpop.f32.mrf.mxu0
        %v1670 = vadd.f32 %v1613, %v1669
        %v1671 = vpop.f32.mrf.mxu0
        %v1672 = vpop.f32.mrf.mxu0
        %v1673 = vadd.f32 %v1613, %v1672
        %v1674 = vpop.f32.mrf.mxu0
        %1675 = vdwg.mxu0
        %v1676 = vadd.f32 %v947, %v1670
        %v1677 = vadd.f32 %v948, %v1673
        %v1678 = vld [vmem:[%s832] sm:$0x1]
        %v1679 = vld [vmem:[%s835] sm:$0x1]
        %v1680 = vsel %vm952, %v1676, 0.0
        %1681 = vadd.xlane.f32.xlu0 %v1680
        %v1682 = vpop.xlane.xlu0 %1681
        %v1683 = vsel %vm952, %v1677, 0.0
        %1684 = vadd.xlane.f32.xlu0 %v1683
        %v1685 = vpop.xlane.xlu0 %1684
        %v1686 = vmul.f32 %v1682, %v959
        %v1687 = vmul.f32 %v1685, %v959
        %v1688 = vsub.f32 %v1676, %v1686
        %v1689 = vsub.f32 %v1677, %v1687
        %v1690 = vmul.f32 %v1688, %v1688
        %v1691 = vmul.f32 %v1689, %v1689
        %v1692 = vsel %vm952, %v1690, 0.0
        %1693 = vadd.xlane.f32.xlu0 %v1692
        %v1694 = vpop.xlane.xlu0 %1693
        %v1695 = vsel %vm952, %v1691, 0.0
        %1696 = vadd.xlane.f32.xlu0 %v1695
        %v1697 = vpop.xlane.xlu0 %1696
        %v1698 = vmul.f32 %v1694, %v959
        %v1699 = vmul.f32 %v1697, %v959
        %v1700 = vadd.f32 %v1698, 1e-06
        %v1701 = vadd.f32 %v1699, 1e-06
        %v1702 = vrsqrt.pop %v1700
        %v1703 = vrsqrt.pop %v1701
        %v1704 = vmul.f32 %v1688, %v1702
        %v1705 = vmul.f32 %v1689, %v1703
        %v1707 = vlaneseq
        %v1708 = vshrl.u32 %v1707, 7
        %v1709 = vsub.s32 0, %v1708
        %v1710 = vrot.slane %v1678, %v1709
        %v1712 = vmul.f32 %v1704, %v1710
        %v1713 = vmul.f32 %v1705, %v1710
        %v1715 = vlaneseq
        %v1716 = vshrl.u32 %v1715, 7
        %v1717 = vsub.s32 0, %v1716
        %v1718 = vrot.slane %v1679, %v1717
        %v1720 = vadd.f32 %v1712, %v1718
        %v1721 = vadd.f32 %v1713, %v1718
        %v1722 = vpack.c.bf16 %v1721, %v1720
        %v1723 = vld [vmem:[%s840] sm:$0xf]
        %v1724 = vld [vmem:[%s840 + $0x4] sm:$0xf]
        %v1725 = vld [vmem:[%s840 + $0x8] sm:$0xf]
        %v1726 = vld [vmem:[%s840 + $0xc] sm:$0xf]
        %v1727 = vld [vmem:[%s843] sm:$0x1]
        %v1729 = vlaneseq
        %v1730 = vshrl.u32 %v1729, 7
        %v1731 = vsub.s32 0, %v1730
        %v1732 = vrot.slane %v1727, %v1731
        %v1738 = vunpack.c.l.b16 %v1723
        %v1739 = vunpack.c.l.b16 %v1724
        %v1740 = vunpack.c.l.b16 %v1725
        %v1741 = vunpack.c.l.b16 %v1726
        %v1742 = vpack.c.b16 %v1739, %v1738
        %v1743 = vpack.c.b16 %v1741, %v1740
        %v1747 = vsel %vm952, %v1722, 0
        %1749 = vmatprep.subr.bf16.mxu0 0
        %1750 = vmatpush1.bf16.msra.mxu0 0
        %1751 = vmatprep.subr.bf16.mxu0 0
        %1752 = vmatpush1.bf16.msra.mxu0 0
        %1753 = vmatprep.subr.bf16.mxu0 0
        %1754 = vmatpush1.bf16.msra.mxu0 0
        %1755 = vmatprep.subr.bf16.mxu0 0
        %1756 = vmatpush1.bf16.msra.mxu0 0
        %1757 = vmatprep.subr.bf16.mxu0 0
        %1758 = vmatpush1.bf16.msra.mxu0 0
        %1759 = vmatprep.subr.bf16.mxu0 0
        %1760 = vmatpush1.bf16.msra.mxu0 0
        %1761 = vmatprep.subr.bf16.mxu0 0
        %1762 = vmatpush1.bf16.msra.mxu0 %v1743
        %1763 = vmatprep.subr.bf16.mxu0 0
        %1764 = vmatpush1.bf16.msra.mxu0 %v1742
        %1765 = vmatprep.subr.bf16.mxu0 0
        %1766 = vmatpush2.bf16.msra.mxu0 0
        %1767 = vmatprep.subr.bf16.mxu0 0
        %1768 = vmatpush2.bf16.msra.mxu0 0
        %1769 = vmatprep.subr.bf16.mxu0 0
        %1770 = vmatpush2.bf16.msra.mxu0 0
        %1771 = vmatprep.subr.bf16.mxu0 0
        %1772 = vmatpush2.bf16.msra.mxu0 0
        %1773 = vmatprep.subr.bf16.mxu0 0
        %1774 = vmatpush2.bf16.msra.mxu0 0
        %1775 = vmatprep.subr.bf16.mxu0 0
        %1776 = vmatpush2.bf16.msra.mxu0 0
        %1777 = vmatprep.subr.bf16.mxu0 0
        %1778 = vmatpush2.bf16.msra.mxu0 0
        %1779 = vmatprep.subr.bf16.mxu0 0
        %1780 = vmatpush2.bf16.msra.mxu0 0
        %1781 = vmatprep.mubr.bf16.mxu0 0
        %1782 = vmatmul.mubr.bf16.gmra.mxu0 %v1747
        %v1783 = vpop.f32.mrf.mxu0
        %v1784 = vadd.f32 %v1732, %v1783
        %v1785 = vpop.f32.mrf.mxu0
        %v1786 = vpop.f32.mrf.mxu0
        %v1787 = vadd.f32 %v1732, %v1786
        %v1788 = vpop.f32.mrf.mxu0
        %1789 = vdwg.mxu0
        %v1790 = vmul.f32 %v1784, 0.5
        %v1791 = vmul.f32 %v1787, 0.5
        %v1792 = vmul.f32 %v1784, 0.044715
        %v1793 = vmul.f32 %v1787, 0.044715
        %v1794 = vmul.f32 %v1792, %v1784
        %v1795 = vmul.f32 %v1793, %v1787
        %v1796 = vmul.f32 %v1794, %v1784
        %v1797 = vmul.f32 %v1795, %v1787
        %v1798 = vadd.f32 %v1784, %v1796
        %v1799 = vadd.f32 %v1787, %v1797
        %v1800 = vmul.f32 %v1798, 0.7978846
        %v1801 = vmul.f32 %v1799, 0.7978846
        %v1802 = vtanh.pop %v1800
        %v1803 = vtanh.pop %v1801
        %v1804 = vadd.f32 %v1802, 1.0
        %v1805 = vadd.f32 %v1803, 1.0
        %v1806 = vmul.f32 %v1790, %v1804
        %v1807 = vmul.f32 %v1791, %v1805
        %v1808 = vpack.c.bf16 %v1807, %v1806
        %v1809 = vld [vmem:[%s848] sm:$0xf]
        %v1810 = vld [vmem:[%s848 + $0x4] sm:$0xf]
        %v1811 = vld [vmem:[%s848 + $0x8] sm:$0xf]
        %v1812 = vld [vmem:[%s848 + $0xc] sm:$0xf]
        %v1813 = vld [vmem:[%s848 + $0x10] sm:$0xf]
        %v1814 = vld [vmem:[%s848 + $0x14] sm:$0xf]
        %v1815 = vld [vmem:[%s848 + $0x18] sm:$0xf]
        %v1816 = vld [vmem:[%s848 + $0x1c] sm:$0xf]
        %v1817 = vld [vmem:[%s848 + $0x20] sm:$0xf]
        %v1818 = vld [vmem:[%s848 + $0x24] sm:$0xf]
        %v1819 = vld [vmem:[%s848 + $0x28] sm:$0xf]
        %v1820 = vld [vmem:[%s848 + $0x2c] sm:$0xf]
        %v1821 = vld [vmem:[%s848 + $0x30] sm:$0xf]
        %v1822 = vld [vmem:[%s848 + $0x34] sm:$0xf]
        %v1823 = vld [vmem:[%s848 + $0x38] sm:$0xf]
        %v1824 = vld [vmem:[%s848 + $0x3c] sm:$0xf]
        %v1825 = vld [vmem:[%s851] sm:$0x1]
        %v1827 = vlaneseq
        %v1828 = vshrl.u32 %v1827, 7
        %v1829 = vsub.s32 0, %v1828
        %v1830 = vrot.slane %v1825, %v1829
        %v1848 = vunpack.c.l.b16 %v1809
        %v1849 = vunpack.c.l.b16 %v1810
        %v1850 = vunpack.c.l.b16 %v1811
        %v1851 = vunpack.c.l.b16 %v1812
        %v1852 = vunpack.c.l.b16 %v1813
        %v1853 = vunpack.c.l.b16 %v1814
        %v1854 = vunpack.c.l.b16 %v1815
        %v1855 = vunpack.c.l.b16 %v1816
        %v1856 = vunpack.c.l.b16 %v1817
        %v1857 = vunpack.c.l.b16 %v1818
        %v1858 = vunpack.c.l.b16 %v1819
        %v1859 = vunpack.c.l.b16 %v1820
        %v1860 = vunpack.c.l.b16 %v1821
        %v1861 = vunpack.c.l.b16 %v1822
        %v1862 = vunpack.c.l.b16 %v1823
        %v1863 = vunpack.c.l.b16 %v1824
        %v1864 = vpack.c.b16 %v1849, %v1848
        %v1865 = vpack.c.b16 %v1851, %v1850
        %v1866 = vpack.c.b16 %v1853, %v1852
        %v1867 = vpack.c.b16 %v1855, %v1854
        %v1868 = vpack.c.b16 %v1857, %v1856
        %v1869 = vpack.c.b16 %v1859, %v1858
        %v1870 = vpack.c.b16 %v1861, %v1860
        %v1871 = vpack.c.b16 %v1863, %v1862
        %1880 = vmatprep.subr.bf16.mxu0 0
        %1881 = vmatpush1.bf16.msra.mxu0 %v1871
        %1882 = vmatprep.subr.bf16.mxu0 0
        %1883 = vmatpush1.bf16.msra.mxu0 %v1870
        %1884 = vmatprep.subr.bf16.mxu0 0
        %1885 = vmatpush1.bf16.msra.mxu0 %v1869
        %1886 = vmatprep.subr.bf16.mxu0 0
        %1887 = vmatpush1.bf16.msra.mxu0 %v1868
        %1888 = vmatprep.subr.bf16.mxu0 0
        %1889 = vmatpush1.bf16.msra.mxu0 %v1867
        %1890 = vmatprep.subr.bf16.mxu0 0
        %1891 = vmatpush1.bf16.msra.mxu0 %v1866
        %1892 = vmatprep.subr.bf16.mxu0 0
        %1893 = vmatpush1.bf16.msra.mxu0 %v1865
        %1894 = vmatprep.subr.bf16.mxu0 0
        %1895 = vmatpush1.bf16.msra.mxu0 %v1864
        %1896 = vmatprep.subr.bf16.mxu0 0
        %1897 = vmatpush2.bf16.msra.mxu0 0
        %1898 = vmatprep.subr.bf16.mxu0 0
        %1899 = vmatpush2.bf16.msra.mxu0 0
        %1900 = vmatprep.subr.bf16.mxu0 0
        %1901 = vmatpush2.bf16.msra.mxu0 0
        %1902 = vmatprep.subr.bf16.mxu0 0
        %1903 = vmatpush2.bf16.msra.mxu0 0
        %1904 = vmatprep.subr.bf16.mxu0 0
        %1905 = vmatpush2.bf16.msra.mxu0 0
        %1906 = vmatprep.subr.bf16.mxu0 0
        %1907 = vmatpush2.bf16.msra.mxu0 0
        %1908 = vmatprep.subr.bf16.mxu0 0
        %1909 = vmatpush2.bf16.msra.mxu0 0
        %1910 = vmatprep.subr.bf16.mxu0 0
        %1911 = vmatpush2.bf16.msra.mxu0 0
        %1912 = vmatprep.mubr.bf16.mxu0 0
        %1913 = vmatmul.mubr.bf16.gmra.mxu0 %v1808
        %v1914 = vpop.f32.mrf.mxu0
        %v1915 = vadd.f32 %v1830, %v1914
        %v1916 = vpop.f32.mrf.mxu0
        %v1917 = vpop.f32.mrf.mxu0
        %v1918 = vadd.f32 %v1830, %v1917
        %v1919 = vpop.f32.mrf.mxu0
        %1920 = vdwg.mxu0
        %v1921 = vadd.f32 %v1676, %v1915
        %v1922 = vadd.f32 %v1677, %v1918
        %1923 = vst.msk [vmem:[#allocation2] sm:$0xff] %vm952, %v1921
        %1924 = vst.msk [vmem:[#allocation2 + $0x8] sm:$0xff] %vm952, %v1922
        %p1925 = scmp.eq.s32.totalorder %s39, 1
        // Predicated region
        $region105: #{tpu_custom_call.1} parent=99 // pred_check
          %p1926 = pneg %p1925
        $region106: #{tpu_custom_call.1} parent=99 // pred_check_branch
          %1928 = sbr.rel (%p1926) target = $region108
        $region107: #{tpu_custom_call.1} parent=99 // pred_region
          %v1929 = vld [vmem:[%s18] sm:$0x1]
          %v1930 = vld [vmem:[%s19] sm:$0x1]
          %v1931 = vsel %vm952, %v1921, 0.0
          %1932 = vadd.xlane.f32.xlu0 %v1931
          %v1933 = vpop.xlane.xlu0 %1932
          %v1934 = vsel %vm952, %v1922, 0.0
          %1935 = vadd.xlane.f32.xlu0 %v1934
          %v1936 = vpop.xlane.xlu0 %1935
          %v1937 = vmul.f32 %v1933, %v959
          %v1938 = vmul.f32 %v1936, %v959
          %v1939 = vsub.f32 %v1921, %v1937
          %v1940 = vsub.f32 %v1922, %v1938
          %v1941 = vmul.f32 %v1939, %v1939
          %v1942 = vmul.f32 %v1940, %v1940
          %v1943 = vsel %vm952, %v1941, 0.0
          %1944 = vadd.xlane.f32.xlu0 %v1943
          %v1945 = vpop.xlane.xlu0 %1944
          %v1946 = vsel %vm952, %v1942, 0.0
          %1947 = vadd.xlane.f32.xlu0 %v1946
          %v1948 = vpop.xlane.xlu0 %1947
          %v1949 = vmul.f32 %v1945, %v959
          %v1950 = vmul.f32 %v1948, %v959
          %v1951 = vadd.f32 %v1949, 1e-06
          %v1952 = vadd.f32 %v1950, 1e-06
          %v1953 = vrsqrt.pop %v1951
          %v1954 = vrsqrt.pop %v1952
          %v1955 = vmul.f32 %v1939, %v1953
          %v1956 = vmul.f32 %v1940, %v1954
          %v1958 = vlaneseq
          %v1959 = vshrl.u32 %v1958, 7
          %v1960 = vsub.s32 0, %v1959
          %v1961 = vrot.slane %v1929, %v1960
          %v1963 = vmul.f32 %v1955, %v1961
          %v1964 = vmul.f32 %v1956, %v1961
          %v1966 = vlaneseq
          %v1967 = vshrl.u32 %v1966, 7
          %v1968 = vsub.s32 0, %v1967
          %v1969 = vrot.slane %v1930, %v1968
          %v1971 = vadd.f32 %v1963, %v1969
          %v1972 = vadd.f32 %v1964, %v1969
          %1973 = vst.msk [vmem:[%s797] sm:$0xff] %vm952, %v1971
          %1974 = vst.msk [vmem:[%s797 + $0x8] sm:$0xff] %vm952, %v1972
        $region108: #{tpu_custom_call.1} parent=99 // pred_fallthru
          _
        %s1975 = sand.u32 %s544, 1
        %s1976 = scalar_lea.sflag [#allocation5], %s1975
        %s1977 = sand.u32 %s544, 1
        %s1978 = smul.addr %s1977, 16
        %s1979 = scalar_lea.vmem [#allocation4], %s1978
        // Predicated region
        $region109: #{tpu_custom_call.1} parent=99 // pred_check
          %p1980 = pneg %p554
        $region110: #{tpu_custom_call.1} parent=99 // pred_check_branch
          %1982 = sbr.rel (%p1980) target = $region112
        $region111: #{tpu_custom_call.1} parent=99 // pred_region
          %s1984 = ssub.s32 256, 256
          %1985 = vsyncadd %s1976, %s1984
          %s1986 = smul.addr %s38, 2
          %s1987 = smul.addr %s1986, 128
          %s1988 = scalar_lea.hbm %s20, %s1987
          %s1989 = sshll.u32 %s1979, 4
          %s1990 = int_to_ptr.vmem [resolvable:$true] %s1989
          %1995 = dma.vmem_to_hbm [thread:$0]  %s1990, 256, %s1988, %s1976, 128, 128, 8
        $region112: #{tpu_custom_call.1} parent=99 // pred_fallthru
          _
      $region100: #{tpu_custom_call.1} parent=5 // pred_fallthru
        _
      %p1996 = scmp.le.s32.totalorder 2, %s29
      // Predicated region
      $region113: #{tpu_custom_call.1} parent=5 // pred_check
        %p1997 = pneg %p1996
      $region114: #{tpu_custom_call.1} parent=5 // pred_check_branch
        %1999 = sbr.rel (%p1997) target = $region116
      $region115: #{tpu_custom_call.1} parent=5 // pred_region
        %s2000 = ssub.s32 %s29, 2
        // Predicated region
        $region117: #{tpu_custom_call.1} parent=115 // pred_check
          %p2001 = pneg %p560
        $region118: #{tpu_custom_call.1} parent=115 // pred_check_branch
          %2003 = sbr.rel (%p2001) target = $region120
        $region119: #{tpu_custom_call.1} parent=115 // pred_region
          %s2004 = sand.u32 %s545, 1
          %s2005 = scalar_lea.sflag [#allocation5], %s2004
          %s2006 = sand.u32 %s545, 1
          %s2007 = smul.addr %s2006, 16
          %s2008 = scalar_lea.vmem [#allocation4], %s2007
          %2009 = dma.done %s2005, 256
        $region120: #{tpu_custom_call.1} parent=115 // pred_fallthru
          _
      $region116: #{tpu_custom_call.1} parent=5 // pred_fallthru
        _
    $region6: #{tpu_custom_call.1} parent=1 // loop_footer
      %s33 = sadd.s32 1, %s29
    $region7: #{tpu_custom_call.1} parent=1 // loop_footer_branch
      %28 = sbr.rel target = $region3
    $region8: #{tpu_custom_call.1} parent=1 // loop_exit
      _
    %2010 = vsyncpa [#allocation5], 1
    %s2011 = scalar_lea.sflag [#allocation5], 1
    %2012 = vsyncpa %s2011, 1

</llo_original>
